<compile_context>
chip_gen: v7x
topology: tpu7x:2x2x1
jax: 0.10.0
libtpu: 0.0.40
codegen_flags: <defaults>
</compile_context>

<pallas_src>
import math
import jax
import jax.numpy as jnp
from jax import lax
from jax.experimental import pallas as pl
from jax.experimental.pallas import tpu as pltpu


# ----------------------------------------------------------------------------
# Fused Pallas kernel: all LSTM layers + classifier in one invocation
# ----------------------------------------------------------------------------
def _make_fused_lstm_kernel(num_layers):
    """Builds the fused kernel.

    Ref order (as passed by pallas_call):
      x(T,B,D)  [time-major],
      [w_ih_t(Din,4H), w_hh_t(H,4H), b(1,4H)] * num_layers,
      cls_w_pad(H,Lp), cls_b_pad(1,Lp),
      out(T*B,Lp)  [time-major rows, lane-dense],
      h_hist scratch (T,B,H)  -- VMEM, time-major, reused by every layer
    """

    def kernel(*refs):
        n_in = 1 + 3 * num_layers + 2
        x_ref = refs[0]
        cls_w_ref, cls_b_ref = refs[n_in - 2], refs[n_in - 1]
        out_ref = refs[n_in]
        h_hist = refs[n_in + 1]                       # (T, B, H) VMEM scratch

        T, B, D = x_ref.shape
        H = h_hist.shape[2]

        # Current layer input, time-major rows (row index = t*B + b).
        # Leading-dim merge only -> free (no relayout copy).
        inp = x_ref[...].reshape(T * B, D)

        for l in range(num_layers):
            w_ih = refs[1 + 3 * l][...]               # (Din, 4H)
            w_hh = refs[2 + 3 * l][...]               # (H, 4H)
            bias = refs[3 + 3 * l][...]               # (1, 4H)  (= b_ih + b_hh)

            # ---- Hoisted input projection: ONE big MXU matmul for all T*B
            # rows, bias folded in.  Reshape to time-major (T, B, 4H) is a
            # pure leading-dim split (free).
            gx = (jnp.dot(inp, w_ih, preferred_element_type=jnp.float32)
                  + bias).reshape(T, B, 4 * H)

            # ---- Sequential recurrence, fully unrolled (T small & static).
            # Per step: one contiguous (B,4H) read, one tiny (B,H)x(H,4H) dot,
            # 2 full-width EUP pushes + 1 tanh(c), one contiguous (B,H) store.
            h = jnp.zeros((B, H), jnp.float32)
            c = jnp.zeros((B, H), jnp.float32)
            for t in range(T):
                gates = gx[t] + jnp.dot(
                    h, w_hh, preferred_element_type=jnp.float32)      # (B, 4H)
                sig = jax.nn.sigmoid(gates)    # full-width: covers i, f, o
                th = jnp.tanh(gates)           # full-width: covers g
                # PyTorch gate order: i, f, g, o.
                i = sig[:, 0 * H:1 * H]
                f = sig[:, 1 * H:2 * H]
                g = th[:, 2 * H:3 * H]
                o = sig[:, 3 * H:4 * H]
                c = f * c + i * g
                h = o * jnp.tanh(c)
                h_hist[t] = h                  # leading-dim contiguous store

            # Next layer (or the classifier) consumes the full hidden-state
            # history; leading-dim merge only -> stays in VMEM, no copy.
            inp = h_hist[...].reshape(T * B, H)

        # ---- Fused classifier: Linear(H -> Lp) + LogSoftmax over lanes.
        # Padded lanes carry bias -1e30 -> exp underflows to 0, so the real-L
        # softmax is unaffected.  Single dense (T*B, Lp) HBM writeback.
        logits = (jnp.dot(inp, cls_w_ref[...], preferred_element_type=jnp.float32)
                  + cls_b_ref[...])                                    # (T*B, Lp)
        z = logits - jnp.max(logits, axis=1, keepdims=True)
        out_ref[...] = z - jnp.log(jnp.sum(jnp.exp(z), axis=1, keepdims=True))

    return kernel


# ----------------------------------------------------------------------------
# Wrapper
# ----------------------------------------------------------------------------
def lstm_forward(X_btd, params):
    """Full forward pass matching the PyTorch module.

    X_btd: (B, T, emb_dim) batch-first.  Returns (B*T, latent_dim) log-probs
    in PyTorch row order (b*T + t).
    """
    B, T, _ = X_btd.shape
    layers = params["lstm_layers"]
    H = layers[0]["w_hh_t"].shape[0]
    L = params["cls_w_t"].shape[1]
    Lp = max(128, ((L + 127) // 128) * 128)   # lane-dense padded latent width

    # Lane-padded classifier: zero weight cols, -1e30 bias in padded lanes so
    # they vanish from the softmax; real lanes are untouched.
    cls_w_pad = jnp.zeros((H, Lp), jnp.float32).at[:, :L].set(params["cls_w_t"])
    cls_b_pad = jnp.full((1, Lp), -1e30, jnp.float32).at[:, :L].set(params["cls_b"])

    # Boundary layout plumbing (once, outside the kernel): time-major input.
    x_tbd = jnp.transpose(X_btd, (1, 0, 2))   # (T, B, D)

    args = [x_tbd]
    for layer in layers:
        args += [layer["w_ih_t"], layer["w_hh_t"], layer["b"]]
    args += [cls_w_pad, cls_b_pad]

    out_pad = pl.pallas_call(
        _make_fused_lstm_kernel(len(layers)),
        out_shape=jax.ShapeDtypeStruct((T * B, Lp), jnp.float32),
        # No grid: whole-array blocks; inputs, weights and activations are all
        # VMEM-resident for the single kernel invocation.
        scratch_shapes=[pltpu.VMEM((T, B, H), jnp.float32)],
        compiler_params=pltpu.CompilerParams(
            vmem_limit_bytes=32 * 1024 * 1024),
    )(*args)

    # Fix time-major (t*B + b) -> batch-major (b*T + t) row ordering once at
    # the very end, then drop the lane padding.
    out = jnp.transpose(out_pad.reshape(T, B, Lp), (1, 0, 2)).reshape(B * T, Lp)
    return out[:, :L]


# ----------------------------------------------------------------------------
# Deterministic parameter init (mirrors the PyTorch __init__ / init_weight)
# ----------------------------------------------------------------------------
def _xavier_uniform(key, shape):
    fan_out, fan_in = shape
    bound = math.sqrt(6.0 / (fan_in + fan_out))
    return jax.random.uniform(key, shape, jnp.float32, -bound, bound)


def init_params(key, emb_dim, hidden, num_layers, latent_dim):
    keys = jax.random.split(key, 2 * num_layers + 2)
    layers = []
    in_dim = emb_dim
    for l in range(num_layers):
        w_ih = _xavier_uniform(keys[2 * l], (4 * hidden, in_dim))      # (4H, Din)
        w_hh = _xavier_uniform(keys[2 * l + 1], (4 * hidden, hidden))  # (4H, H)
        # biases zero-initialised in init_weight(); b = b_ih + b_hh = 0
        layers.append({
            "w_ih_t": jnp.transpose(w_ih),                 # (Din, 4H)
            "w_hh_t": jnp.transpose(w_hh),                 # (H, 4H)
            "b": jnp.zeros((1, 4 * hidden), jnp.float32),
        })
        in_dim = hidden
    bound = 1.0 / math.sqrt(hidden)
    cls_w = jax.random.uniform(keys[-2], (latent_dim, hidden), jnp.float32, -bound, bound)
    cls_b = jax.random.uniform(keys[-1], (1, latent_dim), jnp.float32, -bound, bound)
    return {"lstm_layers": layers, "cls_w_t": jnp.transpose(cls_w), "cls_b": cls_b}


# ----------------------------------------------------------------------------
# Pure-JAX reference (sanity check)
# ----------------------------------------------------------------------------
def lstm_forward_ref(X_btd, params):
    x = jnp.transpose(X_btd, (1, 0, 2))  # (T, B, D)
    for layer in params["lstm_layers"]:
        H = layer["w_hh_t"].shape[0]
        B = x.shape[1]

        def step(carry, xt):
            h, c = carry
            gates = xt @ layer["w_ih_t"] + h @ layer["w_hh_t"] + layer["b"]
            i = jax.nn.sigmoid(gates[:, 0 * H:1 * H])
            f = jax.nn.sigmoid(gates[:, 1 * H:2 * H])
            g = jnp.tanh(gates[:, 2 * H:3 * H])
            o = jax.nn.sigmoid(gates[:, 3 * H:4 * H])
            c = f * c + i * g
            h = o * jnp.tanh(c)
            return (h, c), h

        init = (jnp.zeros((B, H)), jnp.zeros((B, H)))
        _, x = lax.scan(step, init, x)
    out = jnp.transpose(x, (1, 0, 2))
    B, T, H = out.shape
    logits = out.reshape(B * T, H) @ params["cls_w_t"] + params["cls_b"]
    return jax.nn.log_softmax(logits, axis=1)


# ----------------------------------------------------------------------------
if __name__ == "__main__":
    B, T, EMB, HIDDEN, LAYERS, LATENT = 2, 8, 16, 32, 2, 2

    key = jax.random.PRNGKey(0)
    k_x, k_p = jax.random.split(key)
    X = jax.random.normal(k_x, (B, T, EMB), jnp.float32)
    params = init_params(k_p, EMB, HIDDEN, LAYERS, LATENT)

    out = jax.block_until_ready(lstm_forward(X, params))
    ref = jax.block_until_ready(lstm_forward_ref(X, params))

    assert out.shape == (B * T, LATENT), out.shape
    max_err = float(jnp.abs(out - ref).max())
    assert jnp.allclose(out, ref, atol=2e-3, rtol=2e-3), max_err

    print("KERNEL_OK")
</pallas_src>

<mosaic_0001>
module attributes {stable_mosaic.version = 11 : i64} {
  func.func @kernel(%arg0: memref<8x2x16xf32, #tpu.memory_space<vmem>>, %arg1: memref<16x128xf32, #tpu.memory_space<vmem>>, %arg2: memref<32x128xf32, #tpu.memory_space<vmem>>, %arg3: memref<1x128xf32, #tpu.memory_space<vmem>>, %arg4: memref<32x128xf32, #tpu.memory_space<vmem>>, %arg5: memref<32x128xf32, #tpu.memory_space<vmem>>, %arg6: memref<1x128xf32, #tpu.memory_space<vmem>>, %arg7: memref<32x128xf32, #tpu.memory_space<vmem>>, %arg8: memref<1x128xf32, #tpu.memory_space<vmem>>, %arg9: memref<16x128xf32, #tpu.memory_space<vmem>>, %arg10: memref<8x2x32xf32, #tpu.memory_space<vmem>>) attributes {dimension_semantics = [], scalar_prefetch = 0 : i64, scratch_operands = 1 : i64, tpu.core_type = #tpu.core_type<tc>} {
    %c0 = arith.constant 0 : index
    %c0_0 = arith.constant 0 : index
    %c0_1 = arith.constant 0 : index
    %0 = vector.load %arg0[%c0, %c0_0, %c0_1] : memref<8x2x16xf32, #tpu.memory_space<vmem>>, vector<8x2x16xf32>
    %1 = vector.shape_cast %0 : vector<8x2x16xf32> to vector<16x16xf32>
    %c0_2 = arith.constant 0 : index
    %c0_3 = arith.constant 0 : index
    %2 = vector.load %arg1[%c0_2, %c0_3] : memref<16x128xf32, #tpu.memory_space<vmem>>, vector<16x128xf32>
    %c0_4 = arith.constant 0 : index
    %c0_5 = arith.constant 0 : index
    %3 = vector.load %arg2[%c0_4, %c0_5] : memref<32x128xf32, #tpu.memory_space<vmem>>, vector<32x128xf32>
    %c0_6 = arith.constant 0 : index
    %c0_7 = arith.constant 0 : index
    %4 = vector.load %arg3[%c0_6, %c0_7] : memref<1x128xf32, #tpu.memory_space<vmem>>, vector<1x128xf32>
    %cst = arith.constant dense<0.000000e+00> : vector<16x128xf32>
    %5 = tpu.matmul %1, %2, %cst {dimension_numbers = #tpu.dot_dimension_numbers<[1], [0], [0], [1], [0, 0, 1, 1], [], []>} : vector<16x16xf32>, vector<16x128xf32>, vector<16x128xf32> -> vector<16x128xf32>
    %6 = vector.broadcast %4 : vector<1x128xf32> to vector<16x128xf32>
    %7 = arith.addf %5, %6 : vector<16x128xf32>
    %8 = vector.shape_cast %7 : vector<16x128xf32> to vector<8x2x128xf32>
    %cst_8 = arith.constant 0.000000e+00 : f32
    %9 = vector.broadcast %cst_8 : f32 to vector<2x32xf32>
    %cst_9 = arith.constant 0.000000e+00 : f32
    %10 = vector.broadcast %cst_9 : f32 to vector<2x32xf32>
    %11 = vector.extract_strided_slice %8 {offsets = [0, 0, 0], sizes = [1, 2, 128], strides = [1, 1, 1]} : vector<8x2x128xf32> to vector<1x2x128xf32>
    %12 = vector.shape_cast %11 : vector<1x2x128xf32> to vector<2x128xf32>
    %cst_10 = arith.constant dense<0.000000e+00> : vector<2x128xf32>
    %13 = tpu.matmul %9, %3, %cst_10 {dimension_numbers = #tpu.dot_dimension_numbers<[1], [0], [0], [1], [0, 0, 1, 1], [], []>} : vector<2x32xf32>, vector<32x128xf32>, vector<2x128xf32> -> vector<2x128xf32>
    %14 = arith.addf %12, %13 : vector<2x128xf32>
    %15 = arith.negf %14 : vector<2x128xf32>
    %16 = math.exp %15 : vector<2x128xf32>
    %cst_11 = arith.constant 1.000000e+00 : f32
    %17 = vector.broadcast %cst_11 : f32 to vector<2x128xf32>
    %18 = arith.addf %17, %16 : vector<2x128xf32>
    %19 = arith.divf %17, %18 : vector<2x128xf32>
    %20 = math.tanh %14 : vector<2x128xf32>
    %21 = vector.extract_strided_slice %19 {offsets = [0, 0], sizes = [2, 32], strides = [1, 1]} : vector<2x128xf32> to vector<2x32xf32>
    %22 = vector.extract_strided_slice %19 {offsets = [0, 32], sizes = [2, 32], strides = [1, 1]} : vector<2x128xf32> to vector<2x32xf32>
    %23 = vector.extract_strided_slice %20 {offsets = [0, 64], sizes = [2, 32], strides = [1, 1]} : vector<2x128xf32> to vector<2x32xf32>
    %24 = vector.extract_strided_slice %19 {offsets = [0, 96], sizes = [2, 32], strides = [1, 1]} : vector<2x128xf32> to vector<2x32xf32>
    %25 = arith.mulf %22, %10 : vector<2x32xf32>
    %26 = arith.mulf %21, %23 : vector<2x32xf32>
    %27 = arith.addf %25, %26 : vector<2x32xf32>
    %28 = math.tanh %27 : vector<2x32xf32>
    %29 = arith.mulf %24, %28 : vector<2x32xf32>
    %c0_12 = arith.constant 0 : index
    %c0_13 = arith.constant 0 : index
    %c0_14 = arith.constant 0 : index
    %30 = vector.load %arg10[%c0_12, %c0_13, %c0_14] : memref<8x2x32xf32, #tpu.memory_space<vmem>>, vector<1x2x32xf32>
    %31 = vector.shape_cast %30 : vector<1x2x32xf32> to vector<2x32xf32>
    %32 = vector.shape_cast %29 : vector<2x32xf32> to vector<1x2x32xf32>
    tpu.vector_store %arg10[%c0_12, %c0_13, %c0_14], %32 {strides = array<i32>} : memref<8x2x32xf32, #tpu.memory_space<vmem>>, vector<1x2x32xf32>,
    %33 = vector.extract_strided_slice %8 {offsets = [1, 0, 0], sizes = [1, 2, 128], strides = [1, 1, 1]} : vector<8x2x128xf32> to vector<1x2x128xf32>
    %34 = vector.shape_cast %33 : vector<1x2x128xf32> to vector<2x128xf32>
    %cst_15 = arith.constant dense<0.000000e+00> : vector<2x128xf32>
    %35 = tpu.matmul %29, %3, %cst_15 {dimension_numbers = #tpu.dot_dimension_numbers<[1], [0], [0], [1], [0, 0, 1, 1], [], []>} : vector<2x32xf32>, vector<32x128xf32>, vector<2x128xf32> -> vector<2x128xf32>
    %36 = arith.addf %34, %35 : vector<2x128xf32>
    %37 = arith.negf %36 : vector<2x128xf32>
    %38 = math.exp %37 : vector<2x128xf32>
    %cst_16 = arith.constant 1.000000e+00 : f32
    %39 = vector.broadcast %cst_16 : f32 to vector<2x128xf32>
    %40 = arith.addf %39, %38 : vector<2x128xf32>
    %41 = arith.divf %39, %40 : vector<2x128xf32>
    %42 = math.tanh %36 : vector<2x128xf32>
    %43 = vector.extract_strided_slice %41 {offsets = [0, 0], sizes = [2, 32], strides = [1, 1]} : vector<2x128xf32> to vector<2x32xf32>
    %44 = vector.extract_strided_slice %41 {offsets = [0, 32], sizes = [2, 32], strides = [1, 1]} : vector<2x128xf32> to vector<2x32xf32>
    %45 = vector.extract_strided_slice %42 {offsets = [0, 64], sizes = [2, 32], strides = [1, 1]} : vector<2x128xf32> to vector<2x32xf32>
    %46 = vector.extract_strided_slice %41 {offsets = [0, 96], sizes = [2, 32], strides = [1, 1]} : vector<2x128xf32> to vector<2x32xf32>
    %47 = arith.mulf %44, %27 : vector<2x32xf32>
    %48 = arith.mulf %43, %45 : vector<2x32xf32>
    %49 = arith.addf %47, %48 : vector<2x32xf32>
    %50 = math.tanh %49 : vector<2x32xf32>
    %51 = arith.mulf %46, %50 : vector<2x32xf32>
    %c1 = arith.constant 1 : index
    %c0_17 = arith.constant 0 : index
    %c0_18 = arith.constant 0 : index
    %52 = vector.load %arg10[%c1, %c0_17, %c0_18] : memref<8x2x32xf32, #tpu.memory_space<vmem>>, vector<1x2x32xf32>
    %53 = vector.shape_cast %52 : vector<1x2x32xf32> to vector<2x32xf32>
    %54 = vector.shape_cast %51 : vector<2x32xf32> to vector<1x2x32xf32>
    tpu.vector_store %arg10[%c1, %c0_17, %c0_18], %54 {strides = array<i32>} : memref<8x2x32xf32, #tpu.memory_space<vmem>>, vector<1x2x32xf32>,
    %55 = vector.extract_strided_slice %8 {offsets = [2, 0, 0], sizes = [1, 2, 128], strides = [1, 1, 1]} : vector<8x2x128xf32> to vector<1x2x128xf32>
    %56 = vector.shape_cast %55 : vector<1x2x128xf32> to vector<2x128xf32>
    %cst_19 = arith.constant dense<0.000000e+00> : vector<2x128xf32>
    %57 = tpu.matmul %51, %3, %cst_19 {dimension_numbers = #tpu.dot_dimension_numbers<[1], [0], [0], [1], [0, 0, 1, 1], [], []>} : vector<2x32xf32>, vector<32x128xf32>, vector<2x128xf32> -> vector<2x128xf32>
    %58 = arith.addf %56, %57 : vector<2x128xf32>
    %59 = arith.negf %58 : vector<2x128xf32>
    %60 = math.exp %59 : vector<2x128xf32>
    %cst_20 = arith.constant 1.000000e+00 : f32
    %61 = vector.broadcast %cst_20 : f32 to vector<2x128xf32>
    %62 = arith.addf %61, %60 : vector<2x128xf32>
    %63 = arith.divf %61, %62 : vector<2x128xf32>
    %64 = math.tanh %58 : vector<2x128xf32>
    %65 = vector.extract_strided_slice %63 {offsets = [0, 0], sizes = [2, 32], strides = [1, 1]} : vector<2x128xf32> to vector<2x32xf32>
    %66 = vector.extract_strided_slice %63 {offsets = [0, 32], sizes = [2, 32], strides = [1, 1]} : vector<2x128xf32> to vector<2x32xf32>
    %67 = vector.extract_strided_slice %64 {offsets = [0, 64], sizes = [2, 32], strides = [1, 1]} : vector<2x128xf32> to vector<2x32xf32>
    %68 = vector.extract_strided_slice %63 {offsets = [0, 96], sizes = [2, 32], strides = [1, 1]} : vector<2x128xf32> to vector<2x32xf32>
    %69 = arith.mulf %66, %49 : vector<2x32xf32>
    %70 = arith.mulf %65, %67 : vector<2x32xf32>
    %71 = arith.addf %69, %70 : vector<2x32xf32>
    %72 = math.tanh %71 : vector<2x32xf32>
    %73 = arith.mulf %68, %72 : vector<2x32xf32>
    %c2 = arith.constant 2 : index
    %c0_21 = arith.constant 0 : index
    %c0_22 = arith.constant 0 : index
    %74 = vector.load %arg10[%c2, %c0_21, %c0_22] : memref<8x2x32xf32, #tpu.memory_space<vmem>>, vector<1x2x32xf32>
    %75 = vector.shape_cast %74 : vector<1x2x32xf32> to vector<2x32xf32>
    %76 = vector.shape_cast %73 : vector<2x32xf32> to vector<1x2x32xf32>
    tpu.vector_store %arg10[%c2, %c0_21, %c0_22], %76 {strides = array<i32>} : memref<8x2x32xf32, #tpu.memory_space<vmem>>, vector<1x2x32xf32>,
    %77 = vector.extract_strided_slice %8 {offsets = [3, 0, 0], sizes = [1, 2, 128], strides = [1, 1, 1]} : vector<8x2x128xf32> to vector<1x2x128xf32>
    %78 = vector.shape_cast %77 : vector<1x2x128xf32> to vector<2x128xf32>
    %cst_23 = arith.constant dense<0.000000e+00> : vector<2x128xf32>
    %79 = tpu.matmul %73, %3, %cst_23 {dimension_numbers = #tpu.dot_dimension_numbers<[1], [0], [0], [1], [0, 0, 1, 1], [], []>} : vector<2x32xf32>, vector<32x128xf32>, vector<2x128xf32> -> vector<2x128xf32>
    %80 = arith.addf %78, %79 : vector<2x128xf32>
    %81 = arith.negf %80 : vector<2x128xf32>
    %82 = math.exp %81 : vector<2x128xf32>
    %cst_24 = arith.constant 1.000000e+00 : f32
    %83 = vector.broadcast %cst_24 : f32 to vector<2x128xf32>
    %84 = arith.addf %83, %82 : vector<2x128xf32>
    %85 = arith.divf %83, %84 : vector<2x128xf32>
    %86 = math.tanh %80 : vector<2x128xf32>
    %87 = vector.extract_strided_slice %85 {offsets = [0, 0], sizes = [2, 32], strides = [1, 1]} : vector<2x128xf32> to vector<2x32xf32>
    %88 = vector.extract_strided_slice %85 {offsets = [0, 32], sizes = [2, 32], strides = [1, 1]} : vector<2x128xf32> to vector<2x32xf32>
    %89 = vector.extract_strided_slice %86 {offsets = [0, 64], sizes = [2, 32], strides = [1, 1]} : vector<2x128xf32> to vector<2x32xf32>
    %90 = vector.extract_strided_slice %85 {offsets = [0, 96], sizes = [2, 32], strides = [1, 1]} : vector<2x128xf32> to vector<2x32xf32>
    %91 = arith.mulf %88, %71 : vector<2x32xf32>
    %92 = arith.mulf %87, %89 : vector<2x32xf32>
    %93 = arith.addf %91, %92 : vector<2x32xf32>
    %94 = math.tanh %93 : vector<2x32xf32>
    %95 = arith.mulf %90, %94 : vector<2x32xf32>
    %c3 = arith.constant 3 : index
    %c0_25 = arith.constant 0 : index
    %c0_26 = arith.constant 0 : index
    %96 = vector.load %arg10[%c3, %c0_25, %c0_26] : memref<8x2x32xf32, #tpu.memory_space<vmem>>, vector<1x2x32xf32>
    %97 = vector.shape_cast %96 : vector<1x2x32xf32> to vector<2x32xf32>
    %98 = vector.shape_cast %95 : vector<2x32xf32> to vector<1x2x32xf32>
    tpu.vector_store %arg10[%c3, %c0_25, %c0_26], %98 {strides = array<i32>} : memref<8x2x32xf32, #tpu.memory_space<vmem>>, vector<1x2x32xf32>,
    %99 = vector.extract_strided_slice %8 {offsets = [4, 0, 0], sizes = [1, 2, 128], strides = [1, 1, 1]} : vector<8x2x128xf32> to vector<1x2x128xf32>
    %100 = vector.shape_cast %99 : vector<1x2x128xf32> to vector<2x128xf32>
    %cst_27 = arith.constant dense<0.000000e+00> : vector<2x128xf32>
    %101 = tpu.matmul %95, %3, %cst_27 {dimension_numbers = #tpu.dot_dimension_numbers<[1], [0], [0], [1], [0, 0, 1, 1], [], []>} : vector<2x32xf32>, vector<32x128xf32>, vector<2x128xf32> -> vector<2x128xf32>
    %102 = arith.addf %100, %101 : vector<2x128xf32>
    %103 = arith.negf %102 : vector<2x128xf32>
    %104 = math.exp %103 : vector<2x128xf32>
    %cst_28 = arith.constant 1.000000e+00 : f32
    %105 = vector.broadcast %cst_28 : f32 to vector<2x128xf32>
    %106 = arith.addf %105, %104 : vector<2x128xf32>
    %107 = arith.divf %105, %106 : vector<2x128xf32>
    %108 = math.tanh %102 : vector<2x128xf32>
    %109 = vector.extract_strided_slice %107 {offsets = [0, 0], sizes = [2, 32], strides = [1, 1]} : vector<2x128xf32> to vector<2x32xf32>
    %110 = vector.extract_strided_slice %107 {offsets = [0, 32], sizes = [2, 32], strides = [1, 1]} : vector<2x128xf32> to vector<2x32xf32>
    %111 = vector.extract_strided_slice %108 {offsets = [0, 64], sizes = [2, 32], strides = [1, 1]} : vector<2x128xf32> to vector<2x32xf32>
    %112 = vector.extract_strided_slice %107 {offsets = [0, 96], sizes = [2, 32], strides = [1, 1]} : vector<2x128xf32> to vector<2x32xf32>
    %113 = arith.mulf %110, %93 : vector<2x32xf32>
    %114 = arith.mulf %109, %111 : vector<2x32xf32>
    %115 = arith.addf %113, %114 : vector<2x32xf32>
    %116 = math.tanh %115 : vector<2x32xf32>
    %117 = arith.mulf %112, %116 : vector<2x32xf32>
    %c4 = arith.constant 4 : index
    %c0_29 = arith.constant 0 : index
    %c0_30 = arith.constant 0 : index
    %118 = vector.load %arg10[%c4, %c0_29, %c0_30] : memref<8x2x32xf32, #tpu.memory_space<vmem>>, vector<1x2x32xf32>
    %119 = vector.shape_cast %118 : vector<1x2x32xf32> to vector<2x32xf32>
    %120 = vector.shape_cast %117 : vector<2x32xf32> to vector<1x2x32xf32>
    tpu.vector_store %arg10[%c4, %c0_29, %c0_30], %120 {strides = array<i32>} : memref<8x2x32xf32, #tpu.memory_space<vmem>>, vector<1x2x32xf32>,
    %121 = vector.extract_strided_slice %8 {offsets = [5, 0, 0], sizes = [1, 2, 128], strides = [1, 1, 1]} : vector<8x2x128xf32> to vector<1x2x128xf32>
    %122 = vector.shape_cast %121 : vector<1x2x128xf32> to vector<2x128xf32>
    %cst_31 = arith.constant dense<0.000000e+00> : vector<2x128xf32>
    %123 = tpu.matmul %117, %3, %cst_31 {dimension_numbers = #tpu.dot_dimension_numbers<[1], [0], [0], [1], [0, 0, 1, 1], [], []>} : vector<2x32xf32>, vector<32x128xf32>, vector<2x128xf32> -> vector<2x128xf32>
    %124 = arith.addf %122, %123 : vector<2x128xf32>
    %125 = arith.negf %124 : vector<2x128xf32>
    %126 = math.exp %125 : vector<2x128xf32>
    %cst_32 = arith.constant 1.000000e+00 : f32
    %127 = vector.broadcast %cst_32 : f32 to vector<2x128xf32>
    %128 = arith.addf %127, %126 : vector<2x128xf32>
    %129 = arith.divf %127, %128 : vector<2x128xf32>
    %130 = math.tanh %124 : vector<2x128xf32>
    %131 = vector.extract_strided_slice %129 {offsets = [0, 0], sizes = [2, 32], strides = [1, 1]} : vector<2x128xf32> to vector<2x32xf32>
    %132 = vector.extract_strided_slice %129 {offsets = [0, 32], sizes = [2, 32], strides = [1, 1]} : vector<2x128xf32> to vector<2x32xf32>
    %133 = vector.extract_strided_slice %130 {offsets = [0, 64], sizes = [2, 32], strides = [1, 1]} : vector<2x128xf32> to vector<2x32xf32>
    %134 = vector.extract_strided_slice %129 {offsets = [0, 96], sizes = [2, 32], strides = [1, 1]} : vector<2x128xf32> to vector<2x32xf32>
    %135 = arith.mulf %132, %115 : vector<2x32xf32>
    %136 = arith.mulf %131, %133 : vector<2x32xf32>
    %137 = arith.addf %135, %136 : vector<2x32xf32>
    %138 = math.tanh %137 : vector<2x32xf32>
    %139 = arith.mulf %134, %138 : vector<2x32xf32>
    %c5 = arith.constant 5 : index
    %c0_33 = arith.constant 0 : index
    %c0_34 = arith.constant 0 : index
    %140 = vector.load %arg10[%c5, %c0_33, %c0_34] : memref<8x2x32xf32, #tpu.memory_space<vmem>>, vector<1x2x32xf32>
    %141 = vector.shape_cast %140 : vector<1x2x32xf32> to vector<2x32xf32>
    %142 = vector.shape_cast %139 : vector<2x32xf32> to vector<1x2x32xf32>
    tpu.vector_store %arg10[%c5, %c0_33, %c0_34], %142 {strides = array<i32>} : memref<8x2x32xf32, #tpu.memory_space<vmem>>, vector<1x2x32xf32>,
    %143 = vector.extract_strided_slice %8 {offsets = [6, 0, 0], sizes = [1, 2, 128], strides = [1, 1, 1]} : vector<8x2x128xf32> to vector<1x2x128xf32>
    %144 = vector.shape_cast %143 : vector<1x2x128xf32> to vector<2x128xf32>
    %cst_35 = arith.constant dense<0.000000e+00> : vector<2x128xf32>
    %145 = tpu.matmul %139, %3, %cst_35 {dimension_numbers = #tpu.dot_dimension_numbers<[1], [0], [0], [1], [0, 0, 1, 1], [], []>} : vector<2x32xf32>, vector<32x128xf32>, vector<2x128xf32> -> vector<2x128xf32>
    %146 = arith.addf %144, %145 : vector<2x128xf32>
    %147 = arith.negf %146 : vector<2x128xf32>
    %148 = math.exp %147 : vector<2x128xf32>
    %cst_36 = arith.constant 1.000000e+00 : f32
    %149 = vector.broadcast %cst_36 : f32 to vector<2x128xf32>
    %150 = arith.addf %149, %148 : vector<2x128xf32>
    %151 = arith.divf %149, %150 : vector<2x128xf32>
    %152 = math.tanh %146 : vector<2x128xf32>
    %153 = vector.extract_strided_slice %151 {offsets = [0, 0], sizes = [2, 32], strides = [1, 1]} : vector<2x128xf32> to vector<2x32xf32>
    %154 = vector.extract_strided_slice %151 {offsets = [0, 32], sizes = [2, 32], strides = [1, 1]} : vector<2x128xf32> to vector<2x32xf32>
    %155 = vector.extract_strided_slice %152 {offsets = [0, 64], sizes = [2, 32], strides = [1, 1]} : vector<2x128xf32> to vector<2x32xf32>
    %156 = vector.extract_strided_slice %151 {offsets = [0, 96], sizes = [2, 32], strides = [1, 1]} : vector<2x128xf32> to vector<2x32xf32>
    %157 = arith.mulf %154, %137 : vector<2x32xf32>
    %158 = arith.mulf %153, %155 : vector<2x32xf32>
    %159 = arith.addf %157, %158 : vector<2x32xf32>
    %160 = math.tanh %159 : vector<2x32xf32>
    %161 = arith.mulf %156, %160 : vector<2x32xf32>
    %c6 = arith.constant 6 : index
    %c0_37 = arith.constant 0 : index
    %c0_38 = arith.constant 0 : index
    %162 = vector.load %arg10[%c6, %c0_37, %c0_38] : memref<8x2x32xf32, #tpu.memory_space<vmem>>, vector<1x2x32xf32>
    %163 = vector.shape_cast %162 : vector<1x2x32xf32> to vector<2x32xf32>
    %164 = vector.shape_cast %161 : vector<2x32xf32> to vector<1x2x32xf32>
    tpu.vector_store %arg10[%c6, %c0_37, %c0_38], %164 {strides = array<i32>} : memref<8x2x32xf32, #tpu.memory_space<vmem>>, vector<1x2x32xf32>,
    %165 = vector.extract_strided_slice %8 {offsets = [7, 0, 0], sizes = [1, 2, 128], strides = [1, 1, 1]} : vector<8x2x128xf32> to vector<1x2x128xf32>
    %166 = vector.shape_cast %165 : vector<1x2x128xf32> to vector<2x128xf32>
    %cst_39 = arith.constant dense<0.000000e+00> : vector<2x128xf32>
    %167 = tpu.matmul %161, %3, %cst_39 {dimension_numbers = #tpu.dot_dimension_numbers<[1], [0], [0], [1], [0, 0, 1, 1], [], []>} : vector<2x32xf32>, vector<32x128xf32>, vector<2x128xf32> -> vector<2x128xf32>
    %168 = arith.addf %166, %167 : vector<2x128xf32>
    %169 = arith.negf %168 : vector<2x128xf32>
    %170 = math.exp %169 : vector<2x128xf32>
    %cst_40 = arith.constant 1.000000e+00 : f32
    %171 = vector.broadcast %cst_40 : f32 to vector<2x128xf32>
    %172 = arith.addf %171, %170 : vector<2x128xf32>
    %173 = arith.divf %171, %172 : vector<2x128xf32>
    %174 = math.tanh %168 : vector<2x128xf32>
    %175 = vector.extract_strided_slice %173 {offsets = [0, 0], sizes = [2, 32], strides = [1, 1]} : vector<2x128xf32> to vector<2x32xf32>
    %176 = vector.extract_strided_slice %173 {offsets = [0, 32], sizes = [2, 32], strides = [1, 1]} : vector<2x128xf32> to vector<2x32xf32>
    %177 = vector.extract_strided_slice %174 {offsets = [0, 64], sizes = [2, 32], strides = [1, 1]} : vector<2x128xf32> to vector<2x32xf32>
    %178 = vector.extract_strided_slice %173 {offsets = [0, 96], sizes = [2, 32], strides = [1, 1]} : vector<2x128xf32> to vector<2x32xf32>
    %179 = arith.mulf %176, %159 : vector<2x32xf32>
    %180 = arith.mulf %175, %177 : vector<2x32xf32>
    %181 = arith.addf %179, %180 : vector<2x32xf32>
    %182 = math.tanh %181 : vector<2x32xf32>
    %183 = arith.mulf %178, %182 : vector<2x32xf32>
    %c7 = arith.constant 7 : index
    %c0_41 = arith.constant 0 : index
    %c0_42 = arith.constant 0 : index
    %184 = vector.load %arg10[%c7, %c0_41, %c0_42] : memref<8x2x32xf32, #tpu.memory_space<vmem>>, vector<1x2x32xf32>
    %185 = vector.shape_cast %184 : vector<1x2x32xf32> to vector<2x32xf32>
    %186 = vector.shape_cast %183 : vector<2x32xf32> to vector<1x2x32xf32>
    tpu.vector_store %arg10[%c7, %c0_41, %c0_42], %186 {strides = array<i32>} : memref<8x2x32xf32, #tpu.memory_space<vmem>>, vector<1x2x32xf32>,
    %c0_43 = arith.constant 0 : index
    %c0_44 = arith.constant 0 : index
    %c0_45 = arith.constant 0 : index
    %187 = vector.load %arg10[%c0_43, %c0_44, %c0_45] : memref<8x2x32xf32, #tpu.memory_space<vmem>>, vector<8x2x32xf32>
    %188 = vector.shape_cast %187 : vector<8x2x32xf32> to vector<16x32xf32>
    %c0_46 = arith.constant 0 : index
    %c0_47 = arith.constant 0 : index
    %189 = vector.load %arg4[%c0_46, %c0_47] : memref<32x128xf32, #tpu.memory_space<vmem>>, vector<32x128xf32>
    %c0_48 = arith.constant 0 : index
    %c0_49 = arith.constant 0 : index
    %190 = vector.load %arg5[%c0_48, %c0_49] : memref<32x128xf32, #tpu.memory_space<vmem>>, vector<32x128xf32>
    %c0_50 = arith.constant 0 : index
    %c0_51 = arith.constant 0 : index
    %191 = vector.load %arg6[%c0_50, %c0_51] : memref<1x128xf32, #tpu.memory_space<vmem>>, vector<1x128xf32>
    %cst_52 = arith.constant dense<0.000000e+00> : vector<16x128xf32>
    %192 = tpu.matmul %188, %189, %cst_52 {dimension_numbers = #tpu.dot_dimension_numbers<[1], [0], [0], [1], [0, 0, 1, 1], [], []>} : vector<16x32xf32>, vector<32x128xf32>, vector<16x128xf32> -> vector<16x128xf32>
    %193 = vector.broadcast %191 : vector<1x128xf32> to vector<16x128xf32>
    %194 = arith.addf %192, %193 : vector<16x128xf32>
    %195 = vector.shape_cast %194 : vector<16x128xf32> to vector<8x2x128xf32>
    %cst_53 = arith.constant 0.000000e+00 : f32
    %196 = vector.broadcast %cst_53 : f32 to vector<2x32xf32>
    %cst_54 = arith.constant 0.000000e+00 : f32
    %197 = vector.broadcast %cst_54 : f32 to vector<2x32xf32>
    %198 = vector.extract_strided_slice %195 {offsets = [0, 0, 0], sizes = [1, 2, 128], strides = [1, 1, 1]} : vector<8x2x128xf32> to vector<1x2x128xf32>
    %199 = vector.shape_cast %198 : vector<1x2x128xf32> to vector<2x128xf32>
    %cst_55 = arith.constant dense<0.000000e+00> : vector<2x128xf32>
    %200 = tpu.matmul %196, %190, %cst_55 {dimension_numbers = #tpu.dot_dimension_numbers<[1], [0], [0], [1], [0, 0, 1, 1], [], []>} : vector<2x32xf32>, vector<32x128xf32>, vector<2x128xf32> -> vector<2x128xf32>
    %201 = arith.addf %199, %200 : vector<2x128xf32>
    %202 = arith.negf %201 : vector<2x128xf32>
    %203 = math.exp %202 : vector<2x128xf32>
    %cst_56 = arith.constant 1.000000e+00 : f32
    %204 = vector.broadcast %cst_56 : f32 to vector<2x128xf32>
    %205 = arith.addf %204, %203 : vector<2x128xf32>
    %206 = arith.divf %204, %205 : vector<2x128xf32>
    %207 = math.tanh %201 : vector<2x128xf32>
    %208 = vector.extract_strided_slice %206 {offsets = [0, 0], sizes = [2, 32], strides = [1, 1]} : vector<2x128xf32> to vector<2x32xf32>
    %209 = vector.extract_strided_slice %206 {offsets = [0, 32], sizes = [2, 32], strides = [1, 1]} : vector<2x128xf32> to vector<2x32xf32>
    %210 = vector.extract_strided_slice %207 {offsets = [0, 64], sizes = [2, 32], strides = [1, 1]} : vector<2x128xf32> to vector<2x32xf32>
    %211 = vector.extract_strided_slice %206 {offsets = [0, 96], sizes = [2, 32], strides = [1, 1]} : vector<2x128xf32> to vector<2x32xf32>
    %212 = arith.mulf %209, %197 : vector<2x32xf32>
    %213 = arith.mulf %208, %210 : vector<2x32xf32>
    %214 = arith.addf %212, %213 : vector<2x32xf32>
    %215 = math.tanh %214 : vector<2x32xf32>
    %216 = arith.mulf %211, %215 : vector<2x32xf32>
    %c0_57 = arith.constant 0 : index
    %c0_58 = arith.constant 0 : index
    %c0_59 = arith.constant 0 : index
    %217 = vector.load %arg10[%c0_57, %c0_58, %c0_59] : memref<8x2x32xf32, #tpu.memory_space<vmem>>, vector<1x2x32xf32>
    %218 = vector.shape_cast %217 : vector<1x2x32xf32> to vector<2x32xf32>
    %219 = vector.shape_cast %216 : vector<2x32xf32> to vector<1x2x32xf32>
    tpu.vector_store %arg10[%c0_57, %c0_58, %c0_59], %219 {strides = array<i32>} : memref<8x2x32xf32, #tpu.memory_space<vmem>>, vector<1x2x32xf32>,
    %220 = vector.extract_strided_slice %195 {offsets = [1, 0, 0], sizes = [1, 2, 128], strides = [1, 1, 1]} : vector<8x2x128xf32> to vector<1x2x128xf32>
    %221 = vector.shape_cast %220 : vector<1x2x128xf32> to vector<2x128xf32>
    %cst_60 = arith.constant dense<0.000000e+00> : vector<2x128xf32>
    %222 = tpu.matmul %216, %190, %cst_60 {dimension_numbers = #tpu.dot_dimension_numbers<[1], [0], [0], [1], [0, 0, 1, 1], [], []>} : vector<2x32xf32>, vector<32x128xf32>, vector<2x128xf32> -> vector<2x128xf32>
    %223 = arith.addf %221, %222 : vector<2x128xf32>
    %224 = arith.negf %223 : vector<2x128xf32>
    %225 = math.exp %224 : vector<2x128xf32>
    %cst_61 = arith.constant 1.000000e+00 : f32
    %226 = vector.broadcast %cst_61 : f32 to vector<2x128xf32>
    %227 = arith.addf %226, %225 : vector<2x128xf32>
    %228 = arith.divf %226, %227 : vector<2x128xf32>
    %229 = math.tanh %223 : vector<2x128xf32>
    %230 = vector.extract_strided_slice %228 {offsets = [0, 0], sizes = [2, 32], strides = [1, 1]} : vector<2x128xf32> to vector<2x32xf32>
    %231 = vector.extract_strided_slice %228 {offsets = [0, 32], sizes = [2, 32], strides = [1, 1]} : vector<2x128xf32> to vector<2x32xf32>
    %232 = vector.extract_strided_slice %229 {offsets = [0, 64], sizes = [2, 32], strides = [1, 1]} : vector<2x128xf32> to vector<2x32xf32>
    %233 = vector.extract_strided_slice %228 {offsets = [0, 96], sizes = [2, 32], strides = [1, 1]} : vector<2x128xf32> to vector<2x32xf32>
    %234 = arith.mulf %231, %214 : vector<2x32xf32>
    %235 = arith.mulf %230, %232 : vector<2x32xf32>
    %236 = arith.addf %234, %235 : vector<2x32xf32>
    %237 = math.tanh %236 : vector<2x32xf32>
    %238 = arith.mulf %233, %237 : vector<2x32xf32>
    %c1_62 = arith.constant 1 : index
    %c0_63 = arith.constant 0 : index
    %c0_64 = arith.constant 0 : index
    %239 = vector.load %arg10[%c1_62, %c0_63, %c0_64] : memref<8x2x32xf32, #tpu.memory_space<vmem>>, vector<1x2x32xf32>
    %240 = vector.shape_cast %239 : vector<1x2x32xf32> to vector<2x32xf32>
    %241 = vector.shape_cast %238 : vector<2x32xf32> to vector<1x2x32xf32>
    tpu.vector_store %arg10[%c1_62, %c0_63, %c0_64], %241 {strides = array<i32>} : memref<8x2x32xf32, #tpu.memory_space<vmem>>, vector<1x2x32xf32>,
    %242 = vector.extract_strided_slice %195 {offsets = [2, 0, 0], sizes = [1, 2, 128], strides = [1, 1, 1]} : vector<8x2x128xf32> to vector<1x2x128xf32>
    %243 = vector.shape_cast %242 : vector<1x2x128xf32> to vector<2x128xf32>
    %cst_65 = arith.constant dense<0.000000e+00> : vector<2x128xf32>
    %244 = tpu.matmul %238, %190, %cst_65 {dimension_numbers = #tpu.dot_dimension_numbers<[1], [0], [0], [1], [0, 0, 1, 1], [], []>} : vector<2x32xf32>, vector<32x128xf32>, vector<2x128xf32> -> vector<2x128xf32>
    %245 = arith.addf %243, %244 : vector<2x128xf32>
    %246 = arith.negf %245 : vector<2x128xf32>
    %247 = math.exp %246 : vector<2x128xf32>
    %cst_66 = arith.constant 1.000000e+00 : f32
    %248 = vector.broadcast %cst_66 : f32 to vector<2x128xf32>
    %249 = arith.addf %248, %247 : vector<2x128xf32>
    %250 = arith.divf %248, %249 : vector<2x128xf32>
    %251 = math.tanh %245 : vector<2x128xf32>
    %252 = vector.extract_strided_slice %250 {offsets = [0, 0], sizes = [2, 32], strides = [1, 1]} : vector<2x128xf32> to vector<2x32xf32>
    %253 = vector.extract_strided_slice %250 {offsets = [0, 32], sizes = [2, 32], strides = [1, 1]} : vector<2x128xf32> to vector<2x32xf32>
    %254 = vector.extract_strided_slice %251 {offsets = [0, 64], sizes = [2, 32], strides = [1, 1]} : vector<2x128xf32> to vector<2x32xf32>
    %255 = vector.extract_strided_slice %250 {offsets = [0, 96], sizes = [2, 32], strides = [1, 1]} : vector<2x128xf32> to vector<2x32xf32>
    %256 = arith.mulf %253, %236 : vector<2x32xf32>
    %257 = arith.mulf %252, %254 : vector<2x32xf32>
    %258 = arith.addf %256, %257 : vector<2x32xf32>
    %259 = math.tanh %258 : vector<2x32xf32>
    %260 = arith.mulf %255, %259 : vector<2x32xf32>
    %c2_67 = arith.constant 2 : index
    %c0_68 = arith.constant 0 : index
    %c0_69 = arith.constant 0 : index
    %261 = vector.load %arg10[%c2_67, %c0_68, %c0_69] : memref<8x2x32xf32, #tpu.memory_space<vmem>>, vector<1x2x32xf32>
    %262 = vector.shape_cast %261 : vector<1x2x32xf32> to vector<2x32xf32>
    %263 = vector.shape_cast %260 : vector<2x32xf32> to vector<1x2x32xf32>
    tpu.vector_store %arg10[%c2_67, %c0_68, %c0_69], %263 {strides = array<i32>} : memref<8x2x32xf32, #tpu.memory_space<vmem>>, vector<1x2x32xf32>,
    %264 = vector.extract_strided_slice %195 {offsets = [3, 0, 0], sizes = [1, 2, 128], strides = [1, 1, 1]} : vector<8x2x128xf32> to vector<1x2x128xf32>
    %265 = vector.shape_cast %264 : vector<1x2x128xf32> to vector<2x128xf32>
    %cst_70 = arith.constant dense<0.000000e+00> : vector<2x128xf32>
    %266 = tpu.matmul %260, %190, %cst_70 {dimension_numbers = #tpu.dot_dimension_numbers<[1], [0], [0], [1], [0, 0, 1, 1], [], []>} : vector<2x32xf32>, vector<32x128xf32>, vector<2x128xf32> -> vector<2x128xf32>
    %267 = arith.addf %265, %266 : vector<2x128xf32>
    %268 = arith.negf %267 : vector<2x128xf32>
    %269 = math.exp %268 : vector<2x128xf32>
    %cst_71 = arith.constant 1.000000e+00 : f32
    %270 = vector.broadcast %cst_71 : f32 to vector<2x128xf32>
    %271 = arith.addf %270, %269 : vector<2x128xf32>
    %272 = arith.divf %270, %271 : vector<2x128xf32>
    %273 = math.tanh %267 : vector<2x128xf32>
    %274 = vector.extract_strided_slice %272 {offsets = [0, 0], sizes = [2, 32], strides = [1, 1]} : vector<2x128xf32> to vector<2x32xf32>
    %275 = vector.extract_strided_slice %272 {offsets = [0, 32], sizes = [2, 32], strides = [1, 1]} : vector<2x128xf32> to vector<2x32xf32>
    %276 = vector.extract_strided_slice %273 {offsets = [0, 64], sizes = [2, 32], strides = [1, 1]} : vector<2x128xf32> to vector<2x32xf32>
    %277 = vector.extract_strided_slice %272 {offsets = [0, 96], sizes = [2, 32], strides = [1, 1]} : vector<2x128xf32> to vector<2x32xf32>
    %278 = arith.mulf %275, %258 : vector<2x32xf32>
    %279 = arith.mulf %274, %276 : vector<2x32xf32>
    %280 = arith.addf %278, %279 : vector<2x32xf32>
    %281 = math.tanh %280 : vector<2x32xf32>
    %282 = arith.mulf %277, %281 : vector<2x32xf32>
    %c3_72 = arith.constant 3 : index
    %c0_73 = arith.constant 0 : index
    %c0_74 = arith.constant 0 : index
    %283 = vector.load %arg10[%c3_72, %c0_73, %c0_74] : memref<8x2x32xf32, #tpu.memory_space<vmem>>, vector<1x2x32xf32>
    %284 = vector.shape_cast %283 : vector<1x2x32xf32> to vector<2x32xf32>
    %285 = vector.shape_cast %282 : vector<2x32xf32> to vector<1x2x32xf32>
    tpu.vector_store %arg10[%c3_72, %c0_73, %c0_74], %285 {strides = array<i32>} : memref<8x2x32xf32, #tpu.memory_space<vmem>>, vector<1x2x32xf32>,
    %286 = vector.extract_strided_slice %195 {offsets = [4, 0, 0], sizes = [1, 2, 128], strides = [1, 1, 1]} : vector<8x2x128xf32> to vector<1x2x128xf32>
    %287 = vector.shape_cast %286 : vector<1x2x128xf32> to vector<2x128xf32>
    %cst_75 = arith.constant dense<0.000000e+00> : vector<2x128xf32>
    %288 = tpu.matmul %282, %190, %cst_75 {dimension_numbers = #tpu.dot_dimension_numbers<[1], [0], [0], [1], [0, 0, 1, 1], [], []>} : vector<2x32xf32>, vector<32x128xf32>, vector<2x128xf32> -> vector<2x128xf32>
    %289 = arith.addf %287, %288 : vector<2x128xf32>
    %290 = arith.negf %289 : vector<2x128xf32>
    %291 = math.exp %290 : vector<2x128xf32>
    %cst_76 = arith.constant 1.000000e+00 : f32
    %292 = vector.broadcast %cst_76 : f32 to vector<2x128xf32>
    %293 = arith.addf %292, %291 : vector<2x128xf32>
    %294 = arith.divf %292, %293 : vector<2x128xf32>
    %295 = math.tanh %289 : vector<2x128xf32>
    %296 = vector.extract_strided_slice %294 {offsets = [0, 0], sizes = [2, 32], strides = [1, 1]} : vector<2x128xf32> to vector<2x32xf32>
    %297 = vector.extract_strided_slice %294 {offsets = [0, 32], sizes = [2, 32], strides = [1, 1]} : vector<2x128xf32> to vector<2x32xf32>
    %298 = vector.extract_strided_slice %295 {offsets = [0, 64], sizes = [2, 32], strides = [1, 1]} : vector<2x128xf32> to vector<2x32xf32>
    %299 = vector.extract_strided_slice %294 {offsets = [0, 96], sizes = [2, 32], strides = [1, 1]} : vector<2x128xf32> to vector<2x32xf32>
    %300 = arith.mulf %297, %280 : vector<2x32xf32>
    %301 = arith.mulf %296, %298 : vector<2x32xf32>
    %302 = arith.addf %300, %301 : vector<2x32xf32>
    %303 = math.tanh %302 : vector<2x32xf32>
    %304 = arith.mulf %299, %303 : vector<2x32xf32>
    %c4_77 = arith.constant 4 : index
    %c0_78 = arith.constant 0 : index
    %c0_79 = arith.constant 0 : index
    %305 = vector.load %arg10[%c4_77, %c0_78, %c0_79] : memref<8x2x32xf32, #tpu.memory_space<vmem>>, vector<1x2x32xf32>
    %306 = vector.shape_cast %305 : vector<1x2x32xf32> to vector<2x32xf32>
    %307 = vector.shape_cast %304 : vector<2x32xf32> to vector<1x2x32xf32>
    tpu.vector_store %arg10[%c4_77, %c0_78, %c0_79], %307 {strides = array<i32>} : memref<8x2x32xf32, #tpu.memory_space<vmem>>, vector<1x2x32xf32>,
    %308 = vector.extract_strided_slice %195 {offsets = [5, 0, 0], sizes = [1, 2, 128], strides = [1, 1, 1]} : vector<8x2x128xf32> to vector<1x2x128xf32>
    %309 = vector.shape_cast %308 : vector<1x2x128xf32> to vector<2x128xf32>
    %cst_80 = arith.constant dense<0.000000e+00> : vector<2x128xf32>
    %310 = tpu.matmul %304, %190, %cst_80 {dimension_numbers = #tpu.dot_dimension_numbers<[1], [0], [0], [1], [0, 0, 1, 1], [], []>} : vector<2x32xf32>, vector<32x128xf32>, vector<2x128xf32> -> vector<2x128xf32>
    %311 = arith.addf %309, %310 : vector<2x128xf32>
    %312 = arith.negf %311 : vector<2x128xf32>
    %313 = math.exp %312 : vector<2x128xf32>
    %cst_81 = arith.constant 1.000000e+00 : f32
    %314 = vector.broadcast %cst_81 : f32 to vector<2x128xf32>
    %315 = arith.addf %314, %313 : vector<2x128xf32>
    %316 = arith.divf %314, %315 : vector<2x128xf32>
    %317 = math.tanh %311 : vector<2x128xf32>
    %318 = vector.extract_strided_slice %316 {offsets = [0, 0], sizes = [2, 32], strides = [1, 1]} : vector<2x128xf32> to vector<2x32xf32>
    %319 = vector.extract_strided_slice %316 {offsets = [0, 32], sizes = [2, 32], strides = [1, 1]} : vector<2x128xf32> to vector<2x32xf32>
    %320 = vector.extract_strided_slice %317 {offsets = [0, 64], sizes = [2, 32], strides = [1, 1]} : vector<2x128xf32> to vector<2x32xf32>
    %321 = vector.extract_strided_slice %316 {offsets = [0, 96], sizes = [2, 32], strides = [1, 1]} : vector<2x128xf32> to vector<2x32xf32>
    %322 = arith.mulf %319, %302 : vector<2x32xf32>
    %323 = arith.mulf %318, %320 : vector<2x32xf32>
    %324 = arith.addf %322, %323 : vector<2x32xf32>
    %325 = math.tanh %324 : vector<2x32xf32>
    %326 = arith.mulf %321, %325 : vector<2x32xf32>
    %c5_82 = arith.constant 5 : index
    %c0_83 = arith.constant 0 : index
    %c0_84 = arith.constant 0 : index
    %327 = vector.load %arg10[%c5_82, %c0_83, %c0_84] : memref<8x2x32xf32, #tpu.memory_space<vmem>>, vector<1x2x32xf32>
    %328 = vector.shape_cast %327 : vector<1x2x32xf32> to vector<2x32xf32>
    %329 = vector.shape_cast %326 : vector<2x32xf32> to vector<1x2x32xf32>
    tpu.vector_store %arg10[%c5_82, %c0_83, %c0_84], %329 {strides = array<i32>} : memref<8x2x32xf32, #tpu.memory_space<vmem>>, vector<1x2x32xf32>,
    %330 = vector.extract_strided_slice %195 {offsets = [6, 0, 0], sizes = [1, 2, 128], strides = [1, 1, 1]} : vector<8x2x128xf32> to vector<1x2x128xf32>
    %331 = vector.shape_cast %330 : vector<1x2x128xf32> to vector<2x128xf32>
    %cst_85 = arith.constant dense<0.000000e+00> : vector<2x128xf32>
    %332 = tpu.matmul %326, %190, %cst_85 {dimension_numbers = #tpu.dot_dimension_numbers<[1], [0], [0], [1], [0, 0, 1, 1], [], []>} : vector<2x32xf32>, vector<32x128xf32>, vector<2x128xf32> -> vector<2x128xf32>
    %333 = arith.addf %331, %332 : vector<2x128xf32>
    %334 = arith.negf %333 : vector<2x128xf32>
    %335 = math.exp %334 : vector<2x128xf32>
    %cst_86 = arith.constant 1.000000e+00 : f32
    %336 = vector.broadcast %cst_86 : f32 to vector<2x128xf32>
    %337 = arith.addf %336, %335 : vector<2x128xf32>
    %338 = arith.divf %336, %337 : vector<2x128xf32>
    %339 = math.tanh %333 : vector<2x128xf32>
    %340 = vector.extract_strided_slice %338 {offsets = [0, 0], sizes = [2, 32], strides = [1, 1]} : vector<2x128xf32> to vector<2x32xf32>
    %341 = vector.extract_strided_slice %338 {offsets = [0, 32], sizes = [2, 32], strides = [1, 1]} : vector<2x128xf32> to vector<2x32xf32>
    %342 = vector.extract_strided_slice %339 {offsets = [0, 64], sizes = [2, 32], strides = [1, 1]} : vector<2x128xf32> to vector<2x32xf32>
    %343 = vector.extract_strided_slice %338 {offsets = [0, 96], sizes = [2, 32], strides = [1, 1]} : vector<2x128xf32> to vector<2x32xf32>
    %344 = arith.mulf %341, %324 : vector<2x32xf32>
    %345 = arith.mulf %340, %342 : vector<2x32xf32>
    %346 = arith.addf %344, %345 : vector<2x32xf32>
    %347 = math.tanh %346 : vector<2x32xf32>
    %348 = arith.mulf %343, %347 : vector<2x32xf32>
    %c6_87 = arith.constant 6 : index
    %c0_88 = arith.constant 0 : index
    %c0_89 = arith.constant 0 : index
    %349 = vector.load %arg10[%c6_87, %c0_88, %c0_89] : memref<8x2x32xf32, #tpu.memory_space<vmem>>, vector<1x2x32xf32>
    %350 = vector.shape_cast %349 : vector<1x2x32xf32> to vector<2x32xf32>
    %351 = vector.shape_cast %348 : vector<2x32xf32> to vector<1x2x32xf32>
    tpu.vector_store %arg10[%c6_87, %c0_88, %c0_89], %351 {strides = array<i32>} : memref<8x2x32xf32, #tpu.memory_space<vmem>>, vector<1x2x32xf32>,
    %352 = vector.extract_strided_slice %195 {offsets = [7, 0, 0], sizes = [1, 2, 128], strides = [1, 1, 1]} : vector<8x2x128xf32> to vector<1x2x128xf32>
    %353 = vector.shape_cast %352 : vector<1x2x128xf32> to vector<2x128xf32>
    %cst_90 = arith.constant dense<0.000000e+00> : vector<2x128xf32>
    %354 = tpu.matmul %348, %190, %cst_90 {dimension_numbers = #tpu.dot_dimension_numbers<[1], [0], [0], [1], [0, 0, 1, 1], [], []>} : vector<2x32xf32>, vector<32x128xf32>, vector<2x128xf32> -> vector<2x128xf32>
    %355 = arith.addf %353, %354 : vector<2x128xf32>
    %356 = arith.negf %355 : vector<2x128xf32>
    %357 = math.exp %356 : vector<2x128xf32>
    %cst_91 = arith.constant 1.000000e+00 : f32
    %358 = vector.broadcast %cst_91 : f32 to vector<2x128xf32>
    %359 = arith.addf %358, %357 : vector<2x128xf32>
    %360 = arith.divf %358, %359 : vector<2x128xf32>
    %361 = math.tanh %355 : vector<2x128xf32>
    %362 = vector.extract_strided_slice %360 {offsets = [0, 0], sizes = [2, 32], strides = [1, 1]} : vector<2x128xf32> to vector<2x32xf32>
    %363 = vector.extract_strided_slice %360 {offsets = [0, 32], sizes = [2, 32], strides = [1, 1]} : vector<2x128xf32> to vector<2x32xf32>
    %364 = vector.extract_strided_slice %361 {offsets = [0, 64], sizes = [2, 32], strides = [1, 1]} : vector<2x128xf32> to vector<2x32xf32>
    %365 = vector.extract_strided_slice %360 {offsets = [0, 96], sizes = [2, 32], strides = [1, 1]} : vector<2x128xf32> to vector<2x32xf32>
    %366 = arith.mulf %363, %346 : vector<2x32xf32>
    %367 = arith.mulf %362, %364 : vector<2x32xf32>
    %368 = arith.addf %366, %367 : vector<2x32xf32>
    %369 = math.tanh %368 : vector<2x32xf32>
    %370 = arith.mulf %365, %369 : vector<2x32xf32>
    %c7_92 = arith.constant 7 : index
    %c0_93 = arith.constant 0 : index
    %c0_94 = arith.constant 0 : index
    %371 = vector.load %arg10[%c7_92, %c0_93, %c0_94] : memref<8x2x32xf32, #tpu.memory_space<vmem>>, vector<1x2x32xf32>
    %372 = vector.shape_cast %371 : vector<1x2x32xf32> to vector<2x32xf32>
    %373 = vector.shape_cast %370 : vector<2x32xf32> to vector<1x2x32xf32>
    tpu.vector_store %arg10[%c7_92, %c0_93, %c0_94], %373 {strides = array<i32>} : memref<8x2x32xf32, #tpu.memory_space<vmem>>, vector<1x2x32xf32>,
    %c0_95 = arith.constant 0 : index
    %c0_96 = arith.constant 0 : index
    %c0_97 = arith.constant 0 : index
    %374 = vector.load %arg10[%c0_95, %c0_96, %c0_97] : memref<8x2x32xf32, #tpu.memory_space<vmem>>, vector<8x2x32xf32>
    %375 = vector.shape_cast %374 : vector<8x2x32xf32> to vector<16x32xf32>
    %c0_98 = arith.constant 0 : index
    %c0_99 = arith.constant 0 : index
    %376 = vector.load %arg7[%c0_98, %c0_99] : memref<32x128xf32, #tpu.memory_space<vmem>>, vector<32x128xf32>
    %cst_100 = arith.constant dense<0.000000e+00> : vector<16x128xf32>
    %377 = tpu.matmul %375, %376, %cst_100 {dimension_numbers = #tpu.dot_dimension_numbers<[1], [0], [0], [1], [0, 0, 1, 1], [], []>} : vector<16x32xf32>, vector<32x128xf32>, vector<16x128xf32> -> vector<16x128xf32>
    %c0_101 = arith.constant 0 : index
    %c0_102 = arith.constant 0 : index
    %378 = vector.load %arg8[%c0_101, %c0_102] : memref<1x128xf32, #tpu.memory_space<vmem>>, vector<1x128xf32>
    %379 = vector.broadcast %378 : vector<1x128xf32> to vector<16x128xf32>
    %380 = arith.addf %377, %379 : vector<16x128xf32>
    %cst_103 = arith.constant dense<0xFF800000> : vector<16xf32>
    %381 = vector.multi_reduction <maximumf>, %380, %cst_103 [1] : vector<16x128xf32> to vector<16xf32>
    %382 = vector.shape_cast %381 : vector<16xf32> to vector<16x1xf32>
    %383 = vector.broadcast %382 : vector<16x1xf32> to vector<16x128xf32>
    %384 = arith.subf %380, %383 : vector<16x128xf32>
    %385 = math.exp %384 : vector<16x128xf32>
    %cst_104 = arith.constant dense<0.000000e+00> : vector<16xf32>
    %386 = vector.multi_reduction <add>, %385, %cst_104 [1] : vector<16x128xf32> to vector<16xf32>
    %387 = vector.shape_cast %386 : vector<16xf32> to vector<16x1xf32>
    %388 = math.log %387 : vector<16x1xf32>
    %389 = vector.broadcast %388 : vector<16x1xf32> to vector<16x128xf32>
    %390 = arith.subf %384, %389 : vector<16x128xf32>
    %c0_105 = arith.constant 0 : index
    %c0_106 = arith.constant 0 : index
    %391 = vector.load %arg9[%c0_105, %c0_106] : memref<16x128xf32, #tpu.memory_space<vmem>>, vector<16x128xf32>
    tpu.vector_store %arg9[%c0_105, %c0_106], %390 {strides = array<i32>} : memref<16x128xf32, #tpu.memory_space<vmem>>, vector<16x128xf32>,
    return
  }
}

</mosaic_0001>

<llo_original>
// kernel: tpu_custom_call.1
$region0: #{tpu_custom_call.1}
  #allocation0 [shape = 'u32[]', space=smem, size = 0x4, offset = 0x4, fixed_abs, tag = 'smem constant byte address 0x4 - core index']
  #allocation1 [shape = 'u32[144,128]{1,0:T(1,128)}', space=vmem, size = 0x12000, scoped, tag = 'internal scratch']
  #allocation2 [shape = 'f32[8,2,32]{2,1,0:T(2,128)}', space=vmem, size = 0x2000, scoped, tag = 'scratch operand']
  %s0 = inlined_call_operand.hbm [shape: f32[8,2,16], index: 0, kind: input, shape index: {}]
  %s1 = inlined_call_operand.hbm [shape: f32[16,128], index: 1, kind: input, shape index: {}]
  %s2 = inlined_call_operand.hbm [shape: f32[32,128], index: 2, kind: input, shape index: {}]
  %s3 = inlined_call_operand.vmem [shape: f32[1,128], index: 3, kind: input, shape index: {}]
  %s4 = inlined_call_operand.hbm [shape: f32[32,128], index: 4, kind: input, shape index: {}]
  %s5 = inlined_call_operand.hbm [shape: f32[32,128], index: 5, kind: input, shape index: {}]
  %s6 = inlined_call_operand.vmem [shape: f32[1,128], index: 6, kind: input, shape index: {}]
  %s7 = inlined_call_operand.hbm [shape: f32[32,128], index: 7, kind: input, shape index: {}]
  %s8 = inlined_call_operand.vmem [shape: f32[1,128], index: 8, kind: input, shape index: {}]
  %s9 = inlined_call_operand.hbm [shape: f32[16,128], index: 9, kind: output, shape index: {}]
  %s10 = sld [smem:[#allocation0]]
  $region70: #{tpu_custom_call.1} parent=0
    _
  %s12 = ssub.s32 1, %s10
  %s13 = scalar_select 0, %s12, %s10
  $region1: #{tpu_custom_call.1} parent=0
    #allocation3 [shape = 'u8[8192]{0}', space=vmem, size = 0x2000, scoped, tag = 'input window, operand 0, single buffered']
    #allocation4 [shape = 's32[1]{0}', space=sflag, size = 0x4, scoped, tag = 'scoped memory for tpu_custom_call.1']
    #allocation5 [shape = 's32[1]{0}', space=sflag, size = 0x4, scoped, tag = 'scoped memory for tpu_custom_call.1']
    #allocation6 [shape = 'u8[8192]{0}', space=vmem, size = 0x2000, scoped, tag = 'input window, operand 1, single buffered']
    #allocation7 [shape = 's32[1]{0}', space=sflag, size = 0x4, scoped, tag = 'scoped memory for tpu_custom_call.1']
    #allocation8 [shape = 'u8[16384]{0}', space=vmem, size = 0x4000, scoped, tag = 'input window, operand 2, single buffered']
    #allocation9 [shape = 'u8[16384]{0}', space=vmem, size = 0x4000, scoped, tag = 'input window, operand 4, single buffered']
    #allocation10 [shape = 's32[1]{0}', space=sflag, size = 0x4, scoped, tag = 'scoped memory for tpu_custom_call.1']
    #allocation11 [shape = 'u8[16384]{0}', space=vmem, size = 0x4000, scoped, tag = 'input window, operand 5, single buffered']
    #allocation12 [shape = 'u8[16384]{0}', space=vmem, size = 0x4000, scoped, tag = 'input window, operand 7, single buffered']
    #allocation13 [shape = 's32[1]{0}', space=sflag, size = 0x4, scoped, tag = 'scoped memory for tpu_custom_call.1']
    #allocation14 [shape = 'u8[8192]{0}', space=vmem, size = 0x2000, scoped, tag = 'output window, operand 0, single buffered']
    %14 = vsyncpa [#allocation4], 0
    %15 = vsyncpa [#allocation7], 0
    %16 = vsyncpa [#allocation10], 0
    %17 = vsyncpa [#allocation13], 0
    %18 = vsyncpa [#allocation5], 0
    // Predicated region
    $region2: #{tpu_custom_call.1} parent=1 // pred_check
      _
    $region3: #{tpu_custom_call.1} parent=1 // pred_check_branch
      %20 = sbr.rel (0) target = $region5
    $region4: #{tpu_custom_call.1} parent=1 // pred_region
      %s22 = ssub.s32 256, 256
      %23 = vsyncadd [#allocation4], %s22
      %s24 = sshll.u32 [#allocation3], 4
      %s25 = int_to_ptr.vmem [resolvable:$true] %s24
      %30 = dma.hbm_to_vmem [thread:$0]  %s0, 256, %s25, [#allocation4], 32, 32, 2
    $region5: #{tpu_custom_call.1} parent=1 // pred_fallthru
      _
    // Predicated region
    $region6: #{tpu_custom_call.1} parent=1 // pred_check
      _
    $region7: #{tpu_custom_call.1} parent=1 // pred_check_branch
      %32 = sbr.rel (0) target = $region9
    $region8: #{tpu_custom_call.1} parent=1 // pred_region
      %s34 = ssub.s32 256, 256
      %35 = vsyncadd [#allocation7], %s34
      %s36 = sshll.u32 [#allocation6], 4
      %s37 = int_to_ptr.vmem [resolvable:$true] %s36
      %42 = dma.hbm_to_vmem [thread:$0]  %s1, 256, %s37, [#allocation7], 128, 128, 8
    $region9: #{tpu_custom_call.1} parent=1 // pred_fallthru
      _
    // Predicated region
    $region10: #{tpu_custom_call.1} parent=1 // pred_check
      _
    $region11: #{tpu_custom_call.1} parent=1 // pred_check_branch
      %44 = sbr.rel (0) target = $region13
    $region12: #{tpu_custom_call.1} parent=1 // pred_region
      %s46 = ssub.s32 512, 512
      %47 = vsyncadd [#allocation7], %s46
      %s48 = sshll.u32 [#allocation8], 4
      %s49 = int_to_ptr.vmem [resolvable:$true] %s48
      %54 = dma.hbm_to_vmem [thread:$0]  %s2, 512, %s49, [#allocation7], 128, 128, 8
    $region13: #{tpu_custom_call.1} parent=1 // pred_fallthru
      _
    // Predicated region
    $region14: #{tpu_custom_call.1} parent=1 // pred_check
      _
    $region15: #{tpu_custom_call.1} parent=1 // pred_check_branch
      %56 = sbr.rel (0) target = $region17
    $region16: #{tpu_custom_call.1} parent=1 // pred_region
      _
    $region17: #{tpu_custom_call.1} parent=1 // pred_fallthru
      _
    // Predicated region
    $region18: #{tpu_custom_call.1} parent=1 // pred_check
      _
    $region19: #{tpu_custom_call.1} parent=1 // pred_check_branch
      %58 = sbr.rel (0) target = $region21
    $region20: #{tpu_custom_call.1} parent=1 // pred_region
      %s60 = ssub.s32 512, 512
      %61 = vsyncadd [#allocation10], %s60
      %s62 = sshll.u32 [#allocation9], 4
      %s63 = int_to_ptr.vmem [resolvable:$true] %s62
      %68 = dma.hbm_to_vmem [thread:$0]  %s4, 512, %s63, [#allocation10], 128, 128, 8
    $region21: #{tpu_custom_call.1} parent=1 // pred_fallthru
      _
    // Predicated region
    $region22: #{tpu_custom_call.1} parent=1 // pred_check
      _
    $region23: #{tpu_custom_call.1} parent=1 // pred_check_branch
      %70 = sbr.rel (0) target = $region25
    $region24: #{tpu_custom_call.1} parent=1 // pred_region
      %s72 = ssub.s32 512, 512
      %73 = vsyncadd [#allocation10], %s72
      %s74 = sshll.u32 [#allocation11], 4
      %s75 = int_to_ptr.vmem [resolvable:$true] %s74
      %80 = dma.hbm_to_vmem [thread:$0]  %s5, 512, %s75, [#allocation10], 128, 128, 8
    $region25: #{tpu_custom_call.1} parent=1 // pred_fallthru
      _
    // Predicated region
    $region26: #{tpu_custom_call.1} parent=1 // pred_check
      _
    $region27: #{tpu_custom_call.1} parent=1 // pred_check_branch
      %82 = sbr.rel (0) target = $region29
    $region28: #{tpu_custom_call.1} parent=1 // pred_region
      _
    $region29: #{tpu_custom_call.1} parent=1 // pred_fallthru
      _
    // Predicated region
    $region30: #{tpu_custom_call.1} parent=1 // pred_check
      _
    $region31: #{tpu_custom_call.1} parent=1 // pred_check_branch
      %84 = sbr.rel (0) target = $region33
    $region32: #{tpu_custom_call.1} parent=1 // pred_region
      %s86 = ssub.s32 512, 512
      %87 = vsyncadd [#allocation13], %s86
      %s88 = sshll.u32 [#allocation12], 4
      %s89 = int_to_ptr.vmem [resolvable:$true] %s88
      %94 = dma.hbm_to_vmem [thread:$0]  %s7, 512, %s89, [#allocation13], 128, 128, 8
    $region33: #{tpu_custom_call.1} parent=1 // pred_fallthru
      _
    // Predicated region
    $region34: #{tpu_custom_call.1} parent=1 // pred_check
      _
    $region35: #{tpu_custom_call.1} parent=1 // pred_check_branch
      %96 = sbr.rel (0) target = $region37
    $region36: #{tpu_custom_call.1} parent=1 // pred_region
      _
    $region37: #{tpu_custom_call.1} parent=1 // pred_fallthru
      _
    // Predicated region
    $region38: #{tpu_custom_call.1} parent=1 // pred_check
      _
    $region39: #{tpu_custom_call.1} parent=1 // pred_check_branch
      %98 = sbr.rel (0) target = $region41
    $region40: #{tpu_custom_call.1} parent=1 // pred_region
      %99 = dma.done [#allocation4], 256
    $region41: #{tpu_custom_call.1} parent=1 // pred_fallthru
      _
    // Predicated region
    $region42: #{tpu_custom_call.1} parent=1 // pred_check
      _
    $region43: #{tpu_custom_call.1} parent=1 // pred_check_branch
      %101 = sbr.rel (0) target = $region45
    $region44: #{tpu_custom_call.1} parent=1 // pred_region
      %102 = dma.done [#allocation7], 256
    $region45: #{tpu_custom_call.1} parent=1 // pred_fallthru
      _
    // Predicated region
    $region46: #{tpu_custom_call.1} parent=1 // pred_check
      _
    $region47: #{tpu_custom_call.1} parent=1 // pred_check_branch
      %104 = sbr.rel (0) target = $region49
    $region48: #{tpu_custom_call.1} parent=1 // pred_region
      %105 = dma.done [#allocation7], 512
    $region49: #{tpu_custom_call.1} parent=1 // pred_fallthru
      _
    // Predicated region
    $region50: #{tpu_custom_call.1} parent=1 // pred_check
      _
    $region51: #{tpu_custom_call.1} parent=1 // pred_check_branch
      %107 = sbr.rel (0) target = $region53
    $region52: #{tpu_custom_call.1} parent=1 // pred_region
      %108 = dma.done [#allocation10], 512
    $region53: #{tpu_custom_call.1} parent=1 // pred_fallthru
      _
    // Predicated region
    $region54: #{tpu_custom_call.1} parent=1 // pred_check
      _
    $region55: #{tpu_custom_call.1} parent=1 // pred_check_branch
      %110 = sbr.rel (0) target = $region57
    $region56: #{tpu_custom_call.1} parent=1 // pred_region
      %111 = dma.done [#allocation10], 512
    $region57: #{tpu_custom_call.1} parent=1 // pred_fallthru
      _
    // Predicated region
    $region58: #{tpu_custom_call.1} parent=1 // pred_check
      _
    $region59: #{tpu_custom_call.1} parent=1 // pred_check_branch
      %113 = sbr.rel (0) target = $region61
    $region60: #{tpu_custom_call.1} parent=1 // pred_region
      %114 = dma.done [#allocation13], 512
    $region61: #{tpu_custom_call.1} parent=1 // pred_fallthru
      _
    %v115 = vld [vmem:[#allocation3] sm:$0x3]
    %v116 = vld [vmem:[#allocation3 + $0x2] sm:$0x3]
    %v117 = vld [vmem:[#allocation3 + $0x4] sm:$0x3]
    %v118 = vld [vmem:[#allocation3 + $0x6] sm:$0x3]
    %v119 = vld [vmem:[#allocation3 + $0x8] sm:$0x3]
    %v120 = vld [vmem:[#allocation3 + $0xa] sm:$0x3]
    %v121 = vld [vmem:[#allocation3 + $0xc] sm:$0x3]
    %v122 = vld [vmem:[#allocation3 + $0xe] sm:$0x3]
    %v123 = vld [vmem:[#allocation6] sm:$0xff]
    %v124 = vld [vmem:[#allocation6 + $0x8] sm:$0xff]
    %v125 = vld [vmem:[#allocation8] sm:$0xff]
    %v126 = vld [vmem:[#allocation8 + $0x8] sm:$0xff]
    %v127 = vld [vmem:[#allocation8 + $0x10] sm:$0xff]
    %v128 = vld [vmem:[#allocation8 + $0x18] sm:$0xff]
    %v129 = vld [vmem:[%s3] sm:$0x1]
    %v131 = vlaneseq
    %v132 = vshrl.u32 %v131, 7
    %v133 = vsub.s32 0, %v132
    %v134 = vrot.slane %v129, %v133
    %v144 = vcombine.low %v115, %v116
    %v145 = vcombine.low %v117, %v118
    %v147 = vunpack.c.l.s4 1983009808
    %v148 = vunpack.c.0.s8 %v147
    %v149 = vlaneseq
    %v150 = vshrl.u32 %v149, 7
    %v151 = vsub.s32 %v148, %v150
    %v152 = vrot.slane %v144, %v151
    %v154 = vunpack.c.l.s4 1983009808
    %v155 = vunpack.c.0.s8 %v154
    %v156 = vlaneseq
    %v157 = vshrl.u32 %v156, 7
    %v158 = vsub.s32 %v155, %v157
    %v159 = vrot.slane %v145, %v158
    %v160 = vcombine.low %v152, %v159
    %v161 = vcombine.low %v119, %v120
    %v162 = vcombine.low %v121, %v122
    %v164 = vunpack.c.l.s4 1983009808
    %v165 = vunpack.c.0.s8 %v164
    %v166 = vlaneseq
    %v167 = vshrl.u32 %v166, 7
    %v168 = vsub.s32 %v165, %v167
    %v169 = vrot.slane %v161, %v168
    %v171 = vunpack.c.l.s4 1983009808
    %v172 = vunpack.c.0.s8 %v171
    %v173 = vlaneseq
    %v174 = vshrl.u32 %v173, 7
    %v175 = vsub.s32 %v172, %v174
    %v176 = vrot.slane %v162, %v175
    %v177 = vcombine.low %v169, %v176
    %vm178 = vcmask 130048
    %v179 = vsel %vm178, %v160, 0
    %v181 = vsel %vm178, %v177, 0
    %183 = vmatprep.subr.mxu0 0.0
    %184 = vmatpush1.msra.mxu0 %v123
    %185 = vmatprep.subr.mxu0 0.0
    %186 = vmatpush1.msra.mxu0 %v124
    %187 = vmatprep.subr.mxu0 0.0
    %188 = vmatpush1.msra.mxu0 0.0
    %189 = vmatprep.subr.mxu0 0.0
    %190 = vmatpush1.msra.mxu0 0.0
    %191 = vmatprep.subr.mxu0 0.0
    %192 = vmatpush1.msra.mxu0 0.0
    %193 = vmatprep.subr.mxu0 0.0
    %194 = vmatpush1.msra.mxu0 0.0
    %195 = vmatprep.subr.mxu0 0.0
    %196 = vmatpush1.msra.mxu0 0.0
    %197 = vmatprep.subr.mxu0 0.0
    %198 = vmatpush1.msra.mxu0 0.0
    %199 = vmatprep.subr.mxu0 0.0
    %200 = vmatpush1.msra.mxu0 0.0
    %201 = vmatprep.subr.mxu0 0.0
    %202 = vmatpush1.msra.mxu0 0.0
    %203 = vmatprep.subr.mxu0 0.0
    %204 = vmatpush1.msra.mxu0 0.0
    %205 = vmatprep.subr.mxu0 0.0
    %206 = vmatpush1.msra.mxu0 0.0
    %207 = vmatprep.subr.mxu0 0.0
    %208 = vmatpush1.msra.mxu0 0.0
    %209 = vmatprep.subr.mxu0 0.0
    %210 = vmatpush1.msra.mxu0 0.0
    %211 = vmatprep.subr.mxu0 0.0
    %212 = vmatpush1.msra.mxu0 0.0
    %213 = vmatprep.subr.mxu0 0.0
    %214 = vmatpush1.msra.mxu0 0.0
    %215 = vmatprep.subr.mxu0 0.0
    %216 = vmatpush1.msra.mxu0 0.0
    %217 = vmatprep.subr.mxu0 0.0
    %218 = vmatpush1.msra.mxu0 0.0
    %219 = vmatprep.subr.mxu0 0.0
    %220 = vmatpush1.msra.mxu0 0.0
    %221 = vmatprep.subr.mxu0 0.0
    %222 = vmatpush1.msra.mxu0 0.0
    %223 = vmatprep.subr.mxu0 0.0
    %224 = vmatpush1.msra.mxu0 0.0
    %225 = vmatprep.subr.mxu0 0.0
    %226 = vmatpush1.msra.mxu0 0.0
    %227 = vmatprep.subr.mxu0 0.0
    %228 = vmatpush1.msra.mxu0 0.0
    %229 = vmatprep.subr.mxu0 0.0
    %230 = vmatpush1.msra.mxu0 0.0
    %231 = vmatprep.subr.mxu0 0.0
    %232 = vmatpush1.msra.mxu0 0.0
    %233 = vmatprep.subr.mxu0 0.0
    %234 = vmatpush1.msra.mxu0 0.0
    %235 = vmatprep.subr.mxu0 0.0
    %236 = vmatpush1.msra.mxu0 0.0
    %237 = vmatprep.subr.mxu0 0.0
    %238 = vmatpush1.msra.mxu0 0.0
    %239 = vmatprep.subr.mxu0 0.0
    %240 = vmatpush1.msra.mxu0 0.0
    %241 = vmatprep.subr.mxu0 0.0
    %242 = vmatpush1.msra.mxu0 0.0
    %243 = vmatprep.subr.mxu0 0.0
    %244 = vmatpush1.msra.mxu0 0.0
    %245 = vmatprep.subr.mxu0 0.0
    %246 = vmatpush1.msra.mxu0 0.0
    %247 = vmatprep.mubr.f32.mxu0 0.0
    %248 = vmatmul.mubr.f32.gmra.mrb[0].mxu0 %v179
    %v249 = vpop.f32.mrb[0].mxu0
    %v250 = vadd.f32 %v134, %v249
    %v251 = vpop.f32.mrb[0].mxu0
    %252 = vmatprep.mubr.f32.mxu0 0.0
    %253 = vmatmul.mubr.f32.gmra.mrb[0].mxu0 %v181
    %v254 = vpop.f32.mrb[0].mxu0
    %v255 = vadd.f32 %v134, %v254
    %v256 = vpop.f32.mrb[0].mxu0
    %257 = vdwg.mxu0
    %v260 = vcombine.high %v250, %v250
    %v262 = vunpack.c.l.s4 1983009808
    %v263 = vunpack.c.0.s8 %v262
    %v264 = vlaneseq
    %v265 = vshrl.u32 %v264, 7
    %v266 = vsub.s32 %v263, %v265
    %v267 = vrot.slane %v250, %v266
    %v269 = vunpack.c.l.s4 1983009808
    %v270 = vunpack.c.0.s8 %v269
    %v271 = vlaneseq
    %v272 = vshrl.u32 %v271, 7
    %v273 = vsub.s32 %v270, %v272
    %v274 = vrot.slane %v260, %v273
    %v275 = vcombine.high %v267, %v267
    %v276 = vcombine.high %v274, %v274
    %v277 = vcombine.high %v255, %v255
    %v279 = vunpack.c.l.s4 1983009808
    %v280 = vunpack.c.0.s8 %v279
    %v281 = vlaneseq
    %v282 = vshrl.u32 %v281, 7
    %v283 = vsub.s32 %v280, %v282
    %v284 = vrot.slane %v255, %v283
    %v286 = vunpack.c.l.s4 1983009808
    %v287 = vunpack.c.0.s8 %v286
    %v288 = vlaneseq
    %v289 = vshrl.u32 %v288, 7
    %v290 = vsub.s32 %v287, %v289
    %v291 = vrot.slane %v277, %v290
    %v292 = vcombine.high %v284, %v284
    %v293 = vcombine.high %v291, %v291
    %vm302 = vcmask 261120
    %v304 = vsel %vm302, 0.0, 0
    %306 = vmatprep.subr.mxu0 0.0
    %307 = vmatpush1.msra.mxu0 %v125
    %308 = vmatprep.subr.mxu0 0.0
    %309 = vmatpush1.msra.mxu0 %v126
    %310 = vmatprep.subr.mxu0 0.0
    %311 = vmatpush1.msra.mxu0 %v127
    %312 = vmatprep.subr.mxu0 0.0
    %313 = vmatpush1.msra.mxu0 %v128
    %314 = vmatprep.subr.mxu0 0.0
    %315 = vmatpush1.msra.mxu0 0.0
    %316 = vmatprep.subr.mxu0 0.0
    %317 = vmatpush1.msra.mxu0 0.0
    %318 = vmatprep.subr.mxu0 0.0
    %319 = vmatpush1.msra.mxu0 0.0
    %320 = vmatprep.subr.mxu0 0.0
    %321 = vmatpush1.msra.mxu0 0.0
    %322 = vmatprep.subr.mxu0 0.0
    %323 = vmatpush1.msra.mxu0 0.0
    %324 = vmatprep.subr.mxu0 0.0
    %325 = vmatpush1.msra.mxu0 0.0
    %326 = vmatprep.subr.mxu0 0.0
    %327 = vmatpush1.msra.mxu0 0.0
    %328 = vmatprep.subr.mxu0 0.0
    %329 = vmatpush1.msra.mxu0 0.0
    %330 = vmatprep.subr.mxu0 0.0
    %331 = vmatpush1.msra.mxu0 0.0
    %332 = vmatprep.subr.mxu0 0.0
    %333 = vmatpush1.msra.mxu0 0.0
    %334 = vmatprep.subr.mxu0 0.0
    %335 = vmatpush1.msra.mxu0 0.0
    %336 = vmatprep.subr.mxu0 0.0
    %337 = vmatpush1.msra.mxu0 0.0
    %338 = vmatprep.subr.mxu0 0.0
    %339 = vmatpush1.msra.mxu0 0.0
    %340 = vmatprep.subr.mxu0 0.0
    %341 = vmatpush1.msra.mxu0 0.0
    %342 = vmatprep.subr.mxu0 0.0
    %343 = vmatpush1.msra.mxu0 0.0
    %344 = vmatprep.subr.mxu0 0.0
    %345 = vmatpush1.msra.mxu0 0.0
    %346 = vmatprep.subr.mxu0 0.0
    %347 = vmatpush1.msra.mxu0 0.0
    %348 = vmatprep.subr.mxu0 0.0
    %349 = vmatpush1.msra.mxu0 0.0
    %350 = vmatprep.subr.mxu0 0.0
    %351 = vmatpush1.msra.mxu0 0.0
    %352 = vmatprep.subr.mxu0 0.0
    %353 = vmatpush1.msra.mxu0 0.0
    %354 = vmatprep.subr.mxu0 0.0
    %355 = vmatpush1.msra.mxu0 0.0
    %356 = vmatprep.subr.mxu0 0.0
    %357 = vmatpush1.msra.mxu0 0.0
    %358 = vmatprep.subr.mxu0 0.0
    %359 = vmatpush1.msra.mxu0 0.0
    %360 = vmatprep.subr.mxu0 0.0
    %361 = vmatpush1.msra.mxu0 0.0
    %362 = vmatprep.subr.mxu0 0.0
    %363 = vmatpush1.msra.mxu0 0.0
    %364 = vmatprep.subr.mxu0 0.0
    %365 = vmatpush1.msra.mxu0 0.0
    %366 = vmatprep.subr.mxu0 0.0
    %367 = vmatpush1.msra.mxu0 0.0
    %368 = vmatprep.subr.mxu0 0.0
    %369 = vmatpush1.msra.mxu0 0.0
    %370 = vmatprep.mubr.f32.mxu0 0.0
    %371 = vmatmul.mubr.f32.gmra.mrb[0].mxu0 %v304
    %v372 = vpop.f32.mrb[0].mxu0
    %v373 = vadd.f32 0.0, %v372
    %v374 = vpop.f32.mrb[0].mxu0
    %375 = vdwg.mxu0
    %v376 = vadd.f32 %v267, %v373
    %v377 = vxor.u32 %v376, 2147483648
    %v378 = vmul.f32 %v377, 1.442695
    %v379 = vpow.pop %v378
    %v380 = vadd.f32 %v379, 1.0
    %v381 = vrcp.pop %v380
    %v382 = vmul.f32 1.0, %v381
    %v383 = vtanh.pop %v376
    %v384 = vmul.f32 %v382, 0.0
    %386 = vrot.lane.b32.xlu0 %v383, 64
    %v387 = vpop.permute.xlu0 %386
    %v389 = vmul.f32 %v382, %v387
    %391 = vrot.lane.b32.xlu0 %v389, 32
    %v392 = vpop.permute.xlu0 %391
    %v394 = vadd.f32 %v384, %v392
    %v395 = vtanh.pop %v394
    %397 = vrot.lane.b32.xlu0 %v395, 64
    %v398 = vpop.permute.xlu0 %397
    %v400 = vmul.f32 %v382, %v398
    %v403 = vunpack.c.l.s4 1983009808
    %v404 = vunpack.c.0.s8 %v403
    %v405 = vlaneseq
    %v406 = vshrl.u32 %v405, 7
    %v407 = vsub.s32 %v404, %v406
    %v408 = vrot.slane %v400, %v407
    %409 = vrot.lane.b32.xlu0 %v408, 32
    %v410 = vpop.permute.xlu0 %409
    %vm412 = vcmask 254976
    %413 = vst.msk [vmem:[#allocation2] sm:$0x3] %vm412, %v410
    %v414 = vsel %vm302, %v410, 0
    %416 = vmatprep.subr.mxu0 0.0
    %417 = vmatpush1.msra.mxu0 %v125
    %418 = vmatprep.subr.mxu0 0.0
    %419 = vmatpush1.msra.mxu0 %v126
    %420 = vmatprep.subr.mxu0 0.0
    %421 = vmatpush1.msra.mxu0 %v127
    %422 = vmatprep.subr.mxu0 0.0
    %423 = vmatpush1.msra.mxu0 %v128
    %424 = vmatprep.subr.mxu0 0.0
    %425 = vmatpush1.msra.mxu0 0.0
    %426 = vmatprep.subr.mxu0 0.0
    %427 = vmatpush1.msra.mxu0 0.0
    %428 = vmatprep.subr.mxu0 0.0
    %429 = vmatpush1.msra.mxu0 0.0
    %430 = vmatprep.subr.mxu0 0.0
    %431 = vmatpush1.msra.mxu0 0.0
    %432 = vmatprep.subr.mxu0 0.0
    %433 = vmatpush1.msra.mxu0 0.0
    %434 = vmatprep.subr.mxu0 0.0
    %435 = vmatpush1.msra.mxu0 0.0
    %436 = vmatprep.subr.mxu0 0.0
    %437 = vmatpush1.msra.mxu0 0.0
    %438 = vmatprep.subr.mxu0 0.0
    %439 = vmatpush1.msra.mxu0 0.0
    %440 = vmatprep.subr.mxu0 0.0
    %441 = vmatpush1.msra.mxu0 0.0
    %442 = vmatprep.subr.mxu0 0.0
    %443 = vmatpush1.msra.mxu0 0.0
    %444 = vmatprep.subr.mxu0 0.0
    %445 = vmatpush1.msra.mxu0 0.0
    %446 = vmatprep.subr.mxu0 0.0
    %447 = vmatpush1.msra.mxu0 0.0
    %448 = vmatprep.subr.mxu0 0.0
    %449 = vmatpush1.msra.mxu0 0.0
    %450 = vmatprep.subr.mxu0 0.0
    %451 = vmatpush1.msra.mxu0 0.0
    %452 = vmatprep.subr.mxu0 0.0
    %453 = vmatpush1.msra.mxu0 0.0
    %454 = vmatprep.subr.mxu0 0.0
    %455 = vmatpush1.msra.mxu0 0.0
    %456 = vmatprep.subr.mxu0 0.0
    %457 = vmatpush1.msra.mxu0 0.0
    %458 = vmatprep.subr.mxu0 0.0
    %459 = vmatpush1.msra.mxu0 0.0
    %460 = vmatprep.subr.mxu0 0.0
    %461 = vmatpush1.msra.mxu0 0.0
    %462 = vmatprep.subr.mxu0 0.0
    %463 = vmatpush1.msra.mxu0 0.0
    %464 = vmatprep.subr.mxu0 0.0
    %465 = vmatpush1.msra.mxu0 0.0
    %466 = vmatprep.subr.mxu0 0.0
    %467 = vmatpush1.msra.mxu0 0.0
    %468 = vmatprep.subr.mxu0 0.0
    %469 = vmatpush1.msra.mxu0 0.0
    %470 = vmatprep.subr.mxu0 0.0
    %471 = vmatpush1.msra.mxu0 0.0
    %472 = vmatprep.subr.mxu0 0.0
    %473 = vmatpush1.msra.mxu0 0.0
    %474 = vmatprep.subr.mxu0 0.0
    %475 = vmatpush1.msra.mxu0 0.0
    %476 = vmatprep.subr.mxu0 0.0
    %477 = vmatpush1.msra.mxu0 0.0
    %478 = vmatprep.subr.mxu0 0.0
    %479 = vmatpush1.msra.mxu0 0.0
    %480 = vmatprep.mubr.f32.mxu0 0.0
    %481 = vmatmul.mubr.f32.gmra.mrb[0].mxu0 %v414
    %v482 = vpop.f32.mrb[0].mxu0
    %v483 = vadd.f32 0.0, %v482
    %v484 = vpop.f32.mrb[0].mxu0
    %485 = vdwg.mxu0
    %v486 = vadd.f32 %v275, %v483
    %v487 = vxor.u32 %v486, 2147483648
    %v488 = vmul.f32 %v487, 1.442695
    %v489 = vpow.pop %v488
    %v490 = vadd.f32 %v489, 1.0
    %v491 = vrcp.pop %v490
    %v492 = vmul.f32 1.0, %v491
    %v493 = vtanh.pop %v486
    %v494 = vmul.f32 %v492, %v394
    %496 = vrot.lane.b32.xlu0 %v493, 64
    %v497 = vpop.permute.xlu0 %496
    %v499 = vmul.f32 %v492, %v497
    %501 = vrot.lane.b32.xlu0 %v499, 32
    %v502 = vpop.permute.xlu0 %501
    %v504 = vadd.f32 %v494, %v502
    %v505 = vtanh.pop %v504
    %507 = vrot.lane.b32.xlu0 %v505, 64
    %v508 = vpop.permute.xlu0 %507
    %v510 = vmul.f32 %v492, %v508
    %v513 = vunpack.c.l.s4 1983009808
    %v514 = vunpack.c.0.s8 %v513
    %v515 = vlaneseq
    %v516 = vshrl.u32 %v515, 7
    %v517 = vsub.s32 %v514, %v516
    %v518 = vrot.slane %v510, %v517
    %519 = vrot.lane.b32.xlu0 %v518, 32
    %v520 = vpop.permute.xlu0 %519
    %s522 = scalar_lea.vmem [#allocation2], 2
    %523 = vst.msk [vmem:[%s522] sm:$0x3] %vm412, %v520
    %v524 = vsel %vm302, %v520, 0
    %526 = vmatprep.subr.mxu0 0.0
    %527 = vmatpush1.msra.mxu0 %v125
    %528 = vmatprep.subr.mxu0 0.0
    %529 = vmatpush1.msra.mxu0 %v126
    %530 = vmatprep.subr.mxu0 0.0
    %531 = vmatpush1.msra.mxu0 %v127
    %532 = vmatprep.subr.mxu0 0.0
    %533 = vmatpush1.msra.mxu0 %v128
    %534 = vmatprep.subr.mxu0 0.0
    %535 = vmatpush1.msra.mxu0 0.0
    %536 = vmatprep.subr.mxu0 0.0
    %537 = vmatpush1.msra.mxu0 0.0
    %538 = vmatprep.subr.mxu0 0.0
    %539 = vmatpush1.msra.mxu0 0.0
    %540 = vmatprep.subr.mxu0 0.0
    %541 = vmatpush1.msra.mxu0 0.0
    %542 = vmatprep.subr.mxu0 0.0
    %543 = vmatpush1.msra.mxu0 0.0
    %544 = vmatprep.subr.mxu0 0.0
    %545 = vmatpush1.msra.mxu0 0.0
    %546 = vmatprep.subr.mxu0 0.0
    %547 = vmatpush1.msra.mxu0 0.0
    %548 = vmatprep.subr.mxu0 0.0
    %549 = vmatpush1.msra.mxu0 0.0
    %550 = vmatprep.subr.mxu0 0.0
    %551 = vmatpush1.msra.mxu0 0.0
    %552 = vmatprep.subr.mxu0 0.0
    %553 = vmatpush1.msra.mxu0 0.0
    %554 = vmatprep.subr.mxu0 0.0
    %555 = vmatpush1.msra.mxu0 0.0
    %556 = vmatprep.subr.mxu0 0.0
    %557 = vmatpush1.msra.mxu0 0.0
    %558 = vmatprep.subr.mxu0 0.0
    %559 = vmatpush1.msra.mxu0 0.0
    %560 = vmatprep.subr.mxu0 0.0
    %561 = vmatpush1.msra.mxu0 0.0
    %562 = vmatprep.subr.mxu0 0.0
    %563 = vmatpush1.msra.mxu0 0.0
    %564 = vmatprep.subr.mxu0 0.0
    %565 = vmatpush1.msra.mxu0 0.0
    %566 = vmatprep.subr.mxu0 0.0
    %567 = vmatpush1.msra.mxu0 0.0
    %568 = vmatprep.subr.mxu0 0.0
    %569 = vmatpush1.msra.mxu0 0.0
    %570 = vmatprep.subr.mxu0 0.0
    %571 = vmatpush1.msra.mxu0 0.0
    %572 = vmatprep.subr.mxu0 0.0
    %573 = vmatpush1.msra.mxu0 0.0
    %574 = vmatprep.subr.mxu0 0.0
    %575 = vmatpush1.msra.mxu0 0.0
    %576 = vmatprep.subr.mxu0 0.0
    %577 = vmatpush1.msra.mxu0 0.0
    %578 = vmatprep.subr.mxu0 0.0
    %579 = vmatpush1.msra.mxu0 0.0
    %580 = vmatprep.subr.mxu0 0.0
    %581 = vmatpush1.msra.mxu0 0.0
    %582 = vmatprep.subr.mxu0 0.0
    %583 = vmatpush1.msra.mxu0 0.0
    %584 = vmatprep.subr.mxu0 0.0
    %585 = vmatpush1.msra.mxu0 0.0
    %586 = vmatprep.subr.mxu0 0.0
    %587 = vmatpush1.msra.mxu0 0.0
    %588 = vmatprep.subr.mxu0 0.0
    %589 = vmatpush1.msra.mxu0 0.0
    %590 = vmatprep.mubr.f32.mxu0 0.0
    %591 = vmatmul.mubr.f32.gmra.mrb[0].mxu0 %v524
    %v592 = vpop.f32.mrb[0].mxu0
    %v593 = vadd.f32 0.0, %v592
    %v594 = vpop.f32.mrb[0].mxu0
    %595 = vdwg.mxu0
    %v596 = vadd.f32 %v274, %v593
    %v597 = vxor.u32 %v596, 2147483648
    %v598 = vmul.f32 %v597, 1.442695
    %v599 = vpow.pop %v598
    %v600 = vadd.f32 %v599, 1.0
    %v601 = vrcp.pop %v600
    %v602 = vmul.f32 1.0, %v601
    %v603 = vtanh.pop %v596
    %v604 = vmul.f32 %v602, %v504
    %606 = vrot.lane.b32.xlu0 %v603, 64
    %v607 = vpop.permute.xlu0 %606
    %v609 = vmul.f32 %v602, %v607
    %611 = vrot.lane.b32.xlu0 %v609, 32
    %v612 = vpop.permute.xlu0 %611
    %v614 = vadd.f32 %v604, %v612
    %v615 = vtanh.pop %v614
    %617 = vrot.lane.b32.xlu0 %v615, 64
    %v618 = vpop.permute.xlu0 %617
    %v620 = vmul.f32 %v602, %v618
    %v623 = vunpack.c.l.s4 1983009808
    %v624 = vunpack.c.0.s8 %v623
    %v625 = vlaneseq
    %v626 = vshrl.u32 %v625, 7
    %v627 = vsub.s32 %v624, %v626
    %v628 = vrot.slane %v620, %v627
    %629 = vrot.lane.b32.xlu0 %v628, 32
    %v630 = vpop.permute.xlu0 %629
    %s632 = scalar_lea.vmem [#allocation2], 4
    %633 = vst.msk [vmem:[%s632] sm:$0x3] %vm412, %v630
    %v634 = vsel %vm302, %v630, 0
    %636 = vmatprep.subr.mxu0 0.0
    %637 = vmatpush1.msra.mxu0 %v125
    %638 = vmatprep.subr.mxu0 0.0
    %639 = vmatpush1.msra.mxu0 %v126
    %640 = vmatprep.subr.mxu0 0.0
    %641 = vmatpush1.msra.mxu0 %v127
    %642 = vmatprep.subr.mxu0 0.0
    %643 = vmatpush1.msra.mxu0 %v128
    %644 = vmatprep.subr.mxu0 0.0
    %645 = vmatpush1.msra.mxu0 0.0
    %646 = vmatprep.subr.mxu0 0.0
    %647 = vmatpush1.msra.mxu0 0.0
    %648 = vmatprep.subr.mxu0 0.0
    %649 = vmatpush1.msra.mxu0 0.0
    %650 = vmatprep.subr.mxu0 0.0
    %651 = vmatpush1.msra.mxu0 0.0
    %652 = vmatprep.subr.mxu0 0.0
    %653 = vmatpush1.msra.mxu0 0.0
    %654 = vmatprep.subr.mxu0 0.0
    %655 = vmatpush1.msra.mxu0 0.0
    %656 = vmatprep.subr.mxu0 0.0
    %657 = vmatpush1.msra.mxu0 0.0
    %658 = vmatprep.subr.mxu0 0.0
    %659 = vmatpush1.msra.mxu0 0.0
    %660 = vmatprep.subr.mxu0 0.0
    %661 = vmatpush1.msra.mxu0 0.0
    %662 = vmatprep.subr.mxu0 0.0
    %663 = vmatpush1.msra.mxu0 0.0
    %664 = vmatprep.subr.mxu0 0.0
    %665 = vmatpush1.msra.mxu0 0.0
    %666 = vmatprep.subr.mxu0 0.0
    %667 = vmatpush1.msra.mxu0 0.0
    %668 = vmatprep.subr.mxu0 0.0
    %669 = vmatpush1.msra.mxu0 0.0
    %670 = vmatprep.subr.mxu0 0.0
    %671 = vmatpush1.msra.mxu0 0.0
    %672 = vmatprep.subr.mxu0 0.0
    %673 = vmatpush1.msra.mxu0 0.0
    %674 = vmatprep.subr.mxu0 0.0
    %675 = vmatpush1.msra.mxu0 0.0
    %676 = vmatprep.subr.mxu0 0.0
    %677 = vmatpush1.msra.mxu0 0.0
    %678 = vmatprep.subr.mxu0 0.0
    %679 = vmatpush1.msra.mxu0 0.0
    %680 = vmatprep.subr.mxu0 0.0
    %681 = vmatpush1.msra.mxu0 0.0
    %682 = vmatprep.subr.mxu0 0.0
    %683 = vmatpush1.msra.mxu0 0.0
    %684 = vmatprep.subr.mxu0 0.0
    %685 = vmatpush1.msra.mxu0 0.0
    %686 = vmatprep.subr.mxu0 0.0
    %687 = vmatpush1.msra.mxu0 0.0
    %688 = vmatprep.subr.mxu0 0.0
    %689 = vmatpush1.msra.mxu0 0.0
    %690 = vmatprep.subr.mxu0 0.0
    %691 = vmatpush1.msra.mxu0 0.0
    %692 = vmatprep.subr.mxu0 0.0
    %693 = vmatpush1.msra.mxu0 0.0
    %694 = vmatprep.subr.mxu0 0.0
    %695 = vmatpush1.msra.mxu0 0.0
    %696 = vmatprep.subr.mxu0 0.0
    %697 = vmatpush1.msra.mxu0 0.0
    %698 = vmatprep.subr.mxu0 0.0
    %699 = vmatpush1.msra.mxu0 0.0
    %700 = vmatprep.mubr.f32.mxu0 0.0
    %701 = vmatmul.mubr.f32.gmra.mrb[0].mxu0 %v634
    %v702 = vpop.f32.mrb[0].mxu0
    %v703 = vadd.f32 0.0, %v702
    %v704 = vpop.f32.mrb[0].mxu0
    %705 = vdwg.mxu0
    %v706 = vadd.f32 %v276, %v703
    %v707 = vxor.u32 %v706, 2147483648
    %v708 = vmul.f32 %v707, 1.442695
    %v709 = vpow.pop %v708
    %v710 = vadd.f32 %v709, 1.0
    %v711 = vrcp.pop %v710
    %v712 = vmul.f32 1.0, %v711
    %v713 = vtanh.pop %v706
    %v714 = vmul.f32 %v712, %v614
    %716 = vrot.lane.b32.xlu0 %v713, 64
    %v717 = vpop.permute.xlu0 %716
    %v719 = vmul.f32 %v712, %v717
    %721 = vrot.lane.b32.xlu0 %v719, 32
    %v722 = vpop.permute.xlu0 %721
    %v724 = vadd.f32 %v714, %v722
    %v725 = vtanh.pop %v724
    %727 = vrot.lane.b32.xlu0 %v725, 64
    %v728 = vpop.permute.xlu0 %727
    %v730 = vmul.f32 %v712, %v728
    %v733 = vunpack.c.l.s4 1983009808
    %v734 = vunpack.c.0.s8 %v733
    %v735 = vlaneseq
    %v736 = vshrl.u32 %v735, 7
    %v737 = vsub.s32 %v734, %v736
    %v738 = vrot.slane %v730, %v737
    %739 = vrot.lane.b32.xlu0 %v738, 32
    %v740 = vpop.permute.xlu0 %739
    %s742 = scalar_lea.vmem [#allocation2], 6
    %743 = vst.msk [vmem:[%s742] sm:$0x3] %vm412, %v740
    %v744 = vsel %vm302, %v740, 0
    %746 = vmatprep.subr.mxu0 0.0
    %747 = vmatpush1.msra.mxu0 %v125
    %748 = vmatprep.subr.mxu0 0.0
    %749 = vmatpush1.msra.mxu0 %v126
    %750 = vmatprep.subr.mxu0 0.0
    %751 = vmatpush1.msra.mxu0 %v127
    %752 = vmatprep.subr.mxu0 0.0
    %753 = vmatpush1.msra.mxu0 %v128
    %754 = vmatprep.subr.mxu0 0.0
    %755 = vmatpush1.msra.mxu0 0.0
    %756 = vmatprep.subr.mxu0 0.0
    %757 = vmatpush1.msra.mxu0 0.0
    %758 = vmatprep.subr.mxu0 0.0
    %759 = vmatpush1.msra.mxu0 0.0
    %760 = vmatprep.subr.mxu0 0.0
    %761 = vmatpush1.msra.mxu0 0.0
    %762 = vmatprep.subr.mxu0 0.0
    %763 = vmatpush1.msra.mxu0 0.0
    %764 = vmatprep.subr.mxu0 0.0
    %765 = vmatpush1.msra.mxu0 0.0
    %766 = vmatprep.subr.mxu0 0.0
    %767 = vmatpush1.msra.mxu0 0.0
    %768 = vmatprep.subr.mxu0 0.0
    %769 = vmatpush1.msra.mxu0 0.0
    %770 = vmatprep.subr.mxu0 0.0
    %771 = vmatpush1.msra.mxu0 0.0
    %772 = vmatprep.subr.mxu0 0.0
    %773 = vmatpush1.msra.mxu0 0.0
    %774 = vmatprep.subr.mxu0 0.0
    %775 = vmatpush1.msra.mxu0 0.0
    %776 = vmatprep.subr.mxu0 0.0
    %777 = vmatpush1.msra.mxu0 0.0
    %778 = vmatprep.subr.mxu0 0.0
    %779 = vmatpush1.msra.mxu0 0.0
    %780 = vmatprep.subr.mxu0 0.0
    %781 = vmatpush1.msra.mxu0 0.0
    %782 = vmatprep.subr.mxu0 0.0
    %783 = vmatpush1.msra.mxu0 0.0
    %784 = vmatprep.subr.mxu0 0.0
    %785 = vmatpush1.msra.mxu0 0.0
    %786 = vmatprep.subr.mxu0 0.0
    %787 = vmatpush1.msra.mxu0 0.0
    %788 = vmatprep.subr.mxu0 0.0
    %789 = vmatpush1.msra.mxu0 0.0
    %790 = vmatprep.subr.mxu0 0.0
    %791 = vmatpush1.msra.mxu0 0.0
    %792 = vmatprep.subr.mxu0 0.0
    %793 = vmatpush1.msra.mxu0 0.0
    %794 = vmatprep.subr.mxu0 0.0
    %795 = vmatpush1.msra.mxu0 0.0
    %796 = vmatprep.subr.mxu0 0.0
    %797 = vmatpush1.msra.mxu0 0.0
    %798 = vmatprep.subr.mxu0 0.0
    %799 = vmatpush1.msra.mxu0 0.0
    %800 = vmatprep.subr.mxu0 0.0
    %801 = vmatpush1.msra.mxu0 0.0
    %802 = vmatprep.subr.mxu0 0.0
    %803 = vmatpush1.msra.mxu0 0.0
    %804 = vmatprep.subr.mxu0 0.0
    %805 = vmatpush1.msra.mxu0 0.0
    %806 = vmatprep.subr.mxu0 0.0
    %807 = vmatpush1.msra.mxu0 0.0
    %808 = vmatprep.subr.mxu0 0.0
    %809 = vmatpush1.msra.mxu0 0.0
    %810 = vmatprep.mubr.f32.mxu0 0.0
    %811 = vmatmul.mubr.f32.gmra.mrb[0].mxu0 %v744
    %v812 = vpop.f32.mrb[0].mxu0
    %v813 = vadd.f32 0.0, %v812
    %v814 = vpop.f32.mrb[0].mxu0
    %815 = vdwg.mxu0
    %v816 = vadd.f32 %v284, %v813
    %v817 = vxor.u32 %v816, 2147483648
    %v818 = vmul.f32 %v817, 1.442695
    %v819 = vpow.pop %v818
    %v820 = vadd.f32 %v819, 1.0
    %v821 = vrcp.pop %v820
    %v822 = vmul.f32 1.0, %v821
    %v823 = vtanh.pop %v816
    %v824 = vmul.f32 %v822, %v724
    %826 = vrot.lane.b32.xlu0 %v823, 64
    %v827 = vpop.permute.xlu0 %826
    %v829 = vmul.f32 %v822, %v827
    %831 = vrot.lane.b32.xlu0 %v829, 32
    %v832 = vpop.permute.xlu0 %831
    %v834 = vadd.f32 %v824, %v832
    %v835 = vtanh.pop %v834
    %837 = vrot.lane.b32.xlu0 %v835, 64
    %v838 = vpop.permute.xlu0 %837
    %v840 = vmul.f32 %v822, %v838
    %v843 = vunpack.c.l.s4 1983009808
    %v844 = vunpack.c.0.s8 %v843
    %v845 = vlaneseq
    %v846 = vshrl.u32 %v845, 7
    %v847 = vsub.s32 %v844, %v846
    %v848 = vrot.slane %v840, %v847
    %849 = vrot.lane.b32.xlu0 %v848, 32
    %v850 = vpop.permute.xlu0 %849
    %s852 = scalar_lea.vmem [#allocation2], 8
    %853 = vst.msk [vmem:[%s852] sm:$0x3] %vm412, %v850
    %v854 = vsel %vm302, %v850, 0
    %856 = vmatprep.subr.mxu0 0.0
    %857 = vmatpush1.msra.mxu0 %v125
    %858 = vmatprep.subr.mxu0 0.0
    %859 = vmatpush1.msra.mxu0 %v126
    %860 = vmatprep.subr.mxu0 0.0
    %861 = vmatpush1.msra.mxu0 %v127
    %862 = vmatprep.subr.mxu0 0.0
    %863 = vmatpush1.msra.mxu0 %v128
    %864 = vmatprep.subr.mxu0 0.0
    %865 = vmatpush1.msra.mxu0 0.0
    %866 = vmatprep.subr.mxu0 0.0
    %867 = vmatpush1.msra.mxu0 0.0
    %868 = vmatprep.subr.mxu0 0.0
    %869 = vmatpush1.msra.mxu0 0.0
    %870 = vmatprep.subr.mxu0 0.0
    %871 = vmatpush1.msra.mxu0 0.0
    %872 = vmatprep.subr.mxu0 0.0
    %873 = vmatpush1.msra.mxu0 0.0
    %874 = vmatprep.subr.mxu0 0.0
    %875 = vmatpush1.msra.mxu0 0.0
    %876 = vmatprep.subr.mxu0 0.0
    %877 = vmatpush1.msra.mxu0 0.0
    %878 = vmatprep.subr.mxu0 0.0
    %879 = vmatpush1.msra.mxu0 0.0
    %880 = vmatprep.subr.mxu0 0.0
    %881 = vmatpush1.msra.mxu0 0.0
    %882 = vmatprep.subr.mxu0 0.0
    %883 = vmatpush1.msra.mxu0 0.0
    %884 = vmatprep.subr.mxu0 0.0
    %885 = vmatpush1.msra.mxu0 0.0
    %886 = vmatprep.subr.mxu0 0.0
    %887 = vmatpush1.msra.mxu0 0.0
    %888 = vmatprep.subr.mxu0 0.0
    %889 = vmatpush1.msra.mxu0 0.0
    %890 = vmatprep.subr.mxu0 0.0
    %891 = vmatpush1.msra.mxu0 0.0
    %892 = vmatprep.subr.mxu0 0.0
    %893 = vmatpush1.msra.mxu0 0.0
    %894 = vmatprep.subr.mxu0 0.0
    %895 = vmatpush1.msra.mxu0 0.0
    %896 = vmatprep.subr.mxu0 0.0
    %897 = vmatpush1.msra.mxu0 0.0
    %898 = vmatprep.subr.mxu0 0.0
    %899 = vmatpush1.msra.mxu0 0.0
    %900 = vmatprep.subr.mxu0 0.0
    %901 = vmatpush1.msra.mxu0 0.0
    %902 = vmatprep.subr.mxu0 0.0
    %903 = vmatpush1.msra.mxu0 0.0
    %904 = vmatprep.subr.mxu0 0.0
    %905 = vmatpush1.msra.mxu0 0.0
    %906 = vmatprep.subr.mxu0 0.0
    %907 = vmatpush1.msra.mxu0 0.0
    %908 = vmatprep.subr.mxu0 0.0
    %909 = vmatpush1.msra.mxu0 0.0
    %910 = vmatprep.subr.mxu0 0.0
    %911 = vmatpush1.msra.mxu0 0.0
    %912 = vmatprep.subr.mxu0 0.0
    %913 = vmatpush1.msra.mxu0 0.0
    %914 = vmatprep.subr.mxu0 0.0
    %915 = vmatpush1.msra.mxu0 0.0
    %916 = vmatprep.subr.mxu0 0.0
    %917 = vmatpush1.msra.mxu0 0.0
    %918 = vmatprep.subr.mxu0 0.0
    %919 = vmatpush1.msra.mxu0 0.0
    %920 = vmatprep.mubr.f32.mxu0 0.0
    %921 = vmatmul.mubr.f32.gmra.mrb[0].mxu0 %v854
    %v922 = vpop.f32.mrb[0].mxu0
    %v923 = vadd.f32 0.0, %v922
    %v924 = vpop.f32.mrb[0].mxu0
    %925 = vdwg.mxu0
    %v926 = vadd.f32 %v292, %v923
    %v927 = vxor.u32 %v926, 2147483648
    %v928 = vmul.f32 %v927, 1.442695
    %v929 = vpow.pop %v928
    %v930 = vadd.f32 %v929, 1.0
    %v931 = vrcp.pop %v930
    %v932 = vmul.f32 1.0, %v931
    %v933 = vtanh.pop %v926
    %v934 = vmul.f32 %v932, %v834
    %936 = vrot.lane.b32.xlu0 %v933, 64
    %v937 = vpop.permute.xlu0 %936
    %v939 = vmul.f32 %v932, %v937
    %941 = vrot.lane.b32.xlu0 %v939, 32
    %v942 = vpop.permute.xlu0 %941
    %v944 = vadd.f32 %v934, %v942
    %v945 = vtanh.pop %v944
    %947 = vrot.lane.b32.xlu0 %v945, 64
    %v948 = vpop.permute.xlu0 %947
    %v950 = vmul.f32 %v932, %v948
    %v953 = vunpack.c.l.s4 1983009808
    %v954 = vunpack.c.0.s8 %v953
    %v955 = vlaneseq
    %v956 = vshrl.u32 %v955, 7
    %v957 = vsub.s32 %v954, %v956
    %v958 = vrot.slane %v950, %v957
    %959 = vrot.lane.b32.xlu0 %v958, 32
    %v960 = vpop.permute.xlu0 %959
    %s962 = scalar_lea.vmem [#allocation2], 10
    %963 = vst.msk [vmem:[%s962] sm:$0x3] %vm412, %v960
    %v964 = vsel %vm302, %v960, 0
    %966 = vmatprep.subr.mxu0 0.0
    %967 = vmatpush1.msra.mxu0 %v125
    %968 = vmatprep.subr.mxu0 0.0
    %969 = vmatpush1.msra.mxu0 %v126
    %970 = vmatprep.subr.mxu0 0.0
    %971 = vmatpush1.msra.mxu0 %v127
    %972 = vmatprep.subr.mxu0 0.0
    %973 = vmatpush1.msra.mxu0 %v128
    %974 = vmatprep.subr.mxu0 0.0
    %975 = vmatpush1.msra.mxu0 0.0
    %976 = vmatprep.subr.mxu0 0.0
    %977 = vmatpush1.msra.mxu0 0.0
    %978 = vmatprep.subr.mxu0 0.0
    %979 = vmatpush1.msra.mxu0 0.0
    %980 = vmatprep.subr.mxu0 0.0
    %981 = vmatpush1.msra.mxu0 0.0
    %982 = vmatprep.subr.mxu0 0.0
    %983 = vmatpush1.msra.mxu0 0.0
    %984 = vmatprep.subr.mxu0 0.0
    %985 = vmatpush1.msra.mxu0 0.0
    %986 = vmatprep.subr.mxu0 0.0
    %987 = vmatpush1.msra.mxu0 0.0
    %988 = vmatprep.subr.mxu0 0.0
    %989 = vmatpush1.msra.mxu0 0.0
    %990 = vmatprep.subr.mxu0 0.0
    %991 = vmatpush1.msra.mxu0 0.0
    %992 = vmatprep.subr.mxu0 0.0
    %993 = vmatpush1.msra.mxu0 0.0
    %994 = vmatprep.subr.mxu0 0.0
    %995 = vmatpush1.msra.mxu0 0.0
    %996 = vmatprep.subr.mxu0 0.0
    %997 = vmatpush1.msra.mxu0 0.0
    %998 = vmatprep.subr.mxu0 0.0
    %999 = vmatpush1.msra.mxu0 0.0
    %1000 = vmatprep.subr.mxu0 0.0
    %1001 = vmatpush1.msra.mxu0 0.0
    %1002 = vmatprep.subr.mxu0 0.0
    %1003 = vmatpush1.msra.mxu0 0.0
    %1004 = vmatprep.subr.mxu0 0.0
    %1005 = vmatpush1.msra.mxu0 0.0
    %1006 = vmatprep.subr.mxu0 0.0
    %1007 = vmatpush1.msra.mxu0 0.0
    %1008 = vmatprep.subr.mxu0 0.0
    %1009 = vmatpush1.msra.mxu0 0.0
    %1010 = vmatprep.subr.mxu0 0.0
    %1011 = vmatpush1.msra.mxu0 0.0
    %1012 = vmatprep.subr.mxu0 0.0
    %1013 = vmatpush1.msra.mxu0 0.0
    %1014 = vmatprep.subr.mxu0 0.0
    %1015 = vmatpush1.msra.mxu0 0.0
    %1016 = vmatprep.subr.mxu0 0.0
    %1017 = vmatpush1.msra.mxu0 0.0
    %1018 = vmatprep.subr.mxu0 0.0
    %1019 = vmatpush1.msra.mxu0 0.0
    %1020 = vmatprep.subr.mxu0 0.0
    %1021 = vmatpush1.msra.mxu0 0.0
    %1022 = vmatprep.subr.mxu0 0.0
    %1023 = vmatpush1.msra.mxu0 0.0
    %1024 = vmatprep.subr.mxu0 0.0
    %1025 = vmatpush1.msra.mxu0 0.0
    %1026 = vmatprep.subr.mxu0 0.0
    %1027 = vmatpush1.msra.mxu0 0.0
    %1028 = vmatprep.subr.mxu0 0.0
    %1029 = vmatpush1.msra.mxu0 0.0
    %1030 = vmatprep.mubr.f32.mxu0 0.0
    %1031 = vmatmul.mubr.f32.gmra.mrb[0].mxu0 %v964
    %v1032 = vpop.f32.mrb[0].mxu0
    %v1033 = vadd.f32 0.0, %v1032
    %v1034 = vpop.f32.mrb[0].mxu0
    %1035 = vdwg.mxu0
    %v1036 = vadd.f32 %v291, %v1033
    %v1037 = vxor.u32 %v1036, 2147483648
    %v1038 = vmul.f32 %v1037, 1.442695
    %v1039 = vpow.pop %v1038
    %v1040 = vadd.f32 %v1039, 1.0
    %v1041 = vrcp.pop %v1040
    %v1042 = vmul.f32 1.0, %v1041
    %v1043 = vtanh.pop %v1036
    %v1044 = vmul.f32 %v1042, %v944
    %1046 = vrot.lane.b32.xlu0 %v1043, 64
    %v1047 = vpop.permute.xlu0 %1046
    %v1049 = vmul.f32 %v1042, %v1047
    %1051 = vrot.lane.b32.xlu0 %v1049, 32
    %v1052 = vpop.permute.xlu0 %1051
    %v1054 = vadd.f32 %v1044, %v1052
    %v1055 = vtanh.pop %v1054
    %1057 = vrot.lane.b32.xlu0 %v1055, 64
    %v1058 = vpop.permute.xlu0 %1057
    %v1060 = vmul.f32 %v1042, %v1058
    %v1063 = vunpack.c.l.s4 1983009808
    %v1064 = vunpack.c.0.s8 %v1063
    %v1065 = vlaneseq
    %v1066 = vshrl.u32 %v1065, 7
    %v1067 = vsub.s32 %v1064, %v1066
    %v1068 = vrot.slane %v1060, %v1067
    %1069 = vrot.lane.b32.xlu0 %v1068, 32
    %v1070 = vpop.permute.xlu0 %1069
    %s1072 = scalar_lea.vmem [#allocation2], 12
    %1073 = vst.msk [vmem:[%s1072] sm:$0x3] %vm412, %v1070
    %v1074 = vsel %vm302, %v1070, 0
    %1076 = vmatprep.subr.mxu0 0.0
    %1077 = vmatpush1.msra.mxu0 %v125
    %1078 = vmatprep.subr.mxu0 0.0
    %1079 = vmatpush1.msra.mxu0 %v126
    %1080 = vmatprep.subr.mxu0 0.0
    %1081 = vmatpush1.msra.mxu0 %v127
    %1082 = vmatprep.subr.mxu0 0.0
    %1083 = vmatpush1.msra.mxu0 %v128
    %1084 = vmatprep.subr.mxu0 0.0
    %1085 = vmatpush1.msra.mxu0 0.0
    %1086 = vmatprep.subr.mxu0 0.0
    %1087 = vmatpush1.msra.mxu0 0.0
    %1088 = vmatprep.subr.mxu0 0.0
    %1089 = vmatpush1.msra.mxu0 0.0
    %1090 = vmatprep.subr.mxu0 0.0
    %1091 = vmatpush1.msra.mxu0 0.0
    %1092 = vmatprep.subr.mxu0 0.0
    %1093 = vmatpush1.msra.mxu0 0.0
    %1094 = vmatprep.subr.mxu0 0.0
    %1095 = vmatpush1.msra.mxu0 0.0
    %1096 = vmatprep.subr.mxu0 0.0
    %1097 = vmatpush1.msra.mxu0 0.0
    %1098 = vmatprep.subr.mxu0 0.0
    %1099 = vmatpush1.msra.mxu0 0.0
    %1100 = vmatprep.subr.mxu0 0.0
    %1101 = vmatpush1.msra.mxu0 0.0
    %1102 = vmatprep.subr.mxu0 0.0
    %1103 = vmatpush1.msra.mxu0 0.0
    %1104 = vmatprep.subr.mxu0 0.0
    %1105 = vmatpush1.msra.mxu0 0.0
    %1106 = vmatprep.subr.mxu0 0.0
    %1107 = vmatpush1.msra.mxu0 0.0
    %1108 = vmatprep.subr.mxu0 0.0
    %1109 = vmatpush1.msra.mxu0 0.0
    %1110 = vmatprep.subr.mxu0 0.0
    %1111 = vmatpush1.msra.mxu0 0.0
    %1112 = vmatprep.subr.mxu0 0.0
    %1113 = vmatpush1.msra.mxu0 0.0
    %1114 = vmatprep.subr.mxu0 0.0
    %1115 = vmatpush1.msra.mxu0 0.0
    %1116 = vmatprep.subr.mxu0 0.0
    %1117 = vmatpush1.msra.mxu0 0.0
    %1118 = vmatprep.subr.mxu0 0.0
    %1119 = vmatpush1.msra.mxu0 0.0
    %1120 = vmatprep.subr.mxu0 0.0
    %1121 = vmatpush1.msra.mxu0 0.0
    %1122 = vmatprep.subr.mxu0 0.0
    %1123 = vmatpush1.msra.mxu0 0.0
    %1124 = vmatprep.subr.mxu0 0.0
    %1125 = vmatpush1.msra.mxu0 0.0
    %1126 = vmatprep.subr.mxu0 0.0
    %1127 = vmatpush1.msra.mxu0 0.0
    %1128 = vmatprep.subr.mxu0 0.0
    %1129 = vmatpush1.msra.mxu0 0.0
    %1130 = vmatprep.subr.mxu0 0.0
    %1131 = vmatpush1.msra.mxu0 0.0
    %1132 = vmatprep.subr.mxu0 0.0
    %1133 = vmatpush1.msra.mxu0 0.0
    %1134 = vmatprep.subr.mxu0 0.0
    %1135 = vmatpush1.msra.mxu0 0.0
    %1136 = vmatprep.subr.mxu0 0.0
    %1137 = vmatpush1.msra.mxu0 0.0
    %1138 = vmatprep.subr.mxu0 0.0
    %1139 = vmatpush1.msra.mxu0 0.0
    %1140 = vmatprep.mubr.f32.mxu0 0.0
    %1141 = vmatmul.mubr.f32.gmra.mrb[0].mxu0 %v1074
    %v1142 = vpop.f32.mrb[0].mxu0
    %v1143 = vadd.f32 0.0, %v1142
    %v1144 = vpop.f32.mrb[0].mxu0
    %1145 = vdwg.mxu0
    %v1146 = vadd.f32 %v293, %v1143
    %v1147 = vxor.u32 %v1146, 2147483648
    %v1148 = vmul.f32 %v1147, 1.442695
    %v1149 = vpow.pop %v1148
    %v1150 = vadd.f32 %v1149, 1.0
    %v1151 = vrcp.pop %v1150
    %v1152 = vmul.f32 1.0, %v1151
    %v1153 = vtanh.pop %v1146
    %v1154 = vmul.f32 %v1152, %v1054
    %1156 = vrot.lane.b32.xlu0 %v1153, 64
    %v1157 = vpop.permute.xlu0 %1156
    %v1159 = vmul.f32 %v1152, %v1157
    %1161 = vrot.lane.b32.xlu0 %v1159, 32
    %v1162 = vpop.permute.xlu0 %1161
    %v1164 = vadd.f32 %v1154, %v1162
    %v1165 = vtanh.pop %v1164
    %1167 = vrot.lane.b32.xlu0 %v1165, 64
    %v1168 = vpop.permute.xlu0 %1167
    %v1170 = vmul.f32 %v1152, %v1168
    %v1173 = vunpack.c.l.s4 1983009808
    %v1174 = vunpack.c.0.s8 %v1173
    %v1175 = vlaneseq
    %v1176 = vshrl.u32 %v1175, 7
    %v1177 = vsub.s32 %v1174, %v1176
    %v1178 = vrot.slane %v1170, %v1177
    %1179 = vrot.lane.b32.xlu0 %v1178, 32
    %v1180 = vpop.permute.xlu0 %1179
    %s1182 = scalar_lea.vmem [#allocation2], 14
    %1183 = vst.msk [vmem:[%s1182] sm:$0x3] %vm412, %v1180
    %v1184 = vld [vmem:[#allocation2] sm:$0x3]
    %v1185 = vld [vmem:[#allocation2 + $0x2] sm:$0x3]
    %v1186 = vld [vmem:[#allocation2 + $0x4] sm:$0x3]
    %v1187 = vld [vmem:[#allocation2 + $0x6] sm:$0x3]
    %v1188 = vld [vmem:[#allocation2 + $0x8] sm:$0x3]
    %v1189 = vld [vmem:[#allocation2 + $0xa] sm:$0x3]
    %v1190 = vld [vmem:[#allocation2 + $0xc] sm:$0x3]
    %v1191 = vld [vmem:[#allocation2 + $0xe] sm:$0x3]
    %v1192 = vld [vmem:[#allocation9] sm:$0xff]
    %v1193 = vld [vmem:[#allocation9 + $0x8] sm:$0xff]
    %v1194 = vld [vmem:[#allocation9 + $0x10] sm:$0xff]
    %v1195 = vld [vmem:[#allocation9 + $0x18] sm:$0xff]
    %v1196 = vld [vmem:[#allocation11] sm:$0xff]
    %v1197 = vld [vmem:[#allocation11 + $0x8] sm:$0xff]
    %v1198 = vld [vmem:[#allocation11 + $0x10] sm:$0xff]
    %v1199 = vld [vmem:[#allocation11 + $0x18] sm:$0xff]
    %v1200 = vld [vmem:[%s6] sm:$0x1]
    %v1202 = vlaneseq
    %v1203 = vshrl.u32 %v1202, 7
    %v1204 = vsub.s32 0, %v1203
    %v1205 = vrot.slane %v1200, %v1204
    %v1215 = vcombine.low %v1184, %v1185
    %v1216 = vcombine.low %v1186, %v1187
    %v1218 = vunpack.c.l.s4 1983009808
    %v1219 = vunpack.c.0.s8 %v1218
    %v1220 = vlaneseq
    %v1221 = vshrl.u32 %v1220, 7
    %v1222 = vsub.s32 %v1219, %v1221
    %v1223 = vrot.slane %v1215, %v1222
    %v1225 = vunpack.c.l.s4 1983009808
    %v1226 = vunpack.c.0.s8 %v1225
    %v1227 = vlaneseq
    %v1228 = vshrl.u32 %v1227, 7
    %v1229 = vsub.s32 %v1226, %v1228
    %v1230 = vrot.slane %v1216, %v1229
    %v1231 = vcombine.low %v1223, %v1230
    %v1232 = vcombine.low %v1188, %v1189
    %v1233 = vcombine.low %v1190, %v1191
    %v1235 = vunpack.c.l.s4 1983009808
    %v1236 = vunpack.c.0.s8 %v1235
    %v1237 = vlaneseq
    %v1238 = vshrl.u32 %v1237, 7
    %v1239 = vsub.s32 %v1236, %v1238
    %v1240 = vrot.slane %v1232, %v1239
    %v1242 = vunpack.c.l.s4 1983009808
    %v1243 = vunpack.c.0.s8 %v1242
    %v1244 = vlaneseq
    %v1245 = vshrl.u32 %v1244, 7
    %v1246 = vsub.s32 %v1243, %v1245
    %v1247 = vrot.slane %v1233, %v1246
    %v1248 = vcombine.low %v1240, %v1247
    %v1249 = vsel %vm302, %v1231, 0
    %v1251 = vsel %vm302, %v1248, 0
    %1253 = vmatprep.subr.mxu0 0.0
    %1254 = vmatpush1.msra.mxu0 %v1192
    %1255 = vmatprep.subr.mxu0 0.0
    %1256 = vmatpush1.msra.mxu0 %v1193
    %1257 = vmatprep.subr.mxu0 0.0
    %1258 = vmatpush1.msra.mxu0 %v1194
    %1259 = vmatprep.subr.mxu0 0.0
    %1260 = vmatpush1.msra.mxu0 %v1195
    %1261 = vmatprep.subr.mxu0 0.0
    %1262 = vmatpush1.msra.mxu0 0.0
    %1263 = vmatprep.subr.mxu0 0.0
    %1264 = vmatpush1.msra.mxu0 0.0
    %1265 = vmatprep.subr.mxu0 0.0
    %1266 = vmatpush1.msra.mxu0 0.0
    %1267 = vmatprep.subr.mxu0 0.0
    %1268 = vmatpush1.msra.mxu0 0.0
    %1269 = vmatprep.subr.mxu0 0.0
    %1270 = vmatpush1.msra.mxu0 0.0
    %1271 = vmatprep.subr.mxu0 0.0
    %1272 = vmatpush1.msra.mxu0 0.0
    %1273 = vmatprep.subr.mxu0 0.0
    %1274 = vmatpush1.msra.mxu0 0.0
    %1275 = vmatprep.subr.mxu0 0.0
    %1276 = vmatpush1.msra.mxu0 0.0
    %1277 = vmatprep.subr.mxu0 0.0
    %1278 = vmatpush1.msra.mxu0 0.0
    %1279 = vmatprep.subr.mxu0 0.0
    %1280 = vmatpush1.msra.mxu0 0.0
    %1281 = vmatprep.subr.mxu0 0.0
    %1282 = vmatpush1.msra.mxu0 0.0
    %1283 = vmatprep.subr.mxu0 0.0
    %1284 = vmatpush1.msra.mxu0 0.0
    %1285 = vmatprep.subr.mxu0 0.0
    %1286 = vmatpush1.msra.mxu0 0.0
    %1287 = vmatprep.subr.mxu0 0.0
    %1288 = vmatpush1.msra.mxu0 0.0
    %1289 = vmatprep.subr.mxu0 0.0
    %1290 = vmatpush1.msra.mxu0 0.0
    %1291 = vmatprep.subr.mxu0 0.0
    %1292 = vmatpush1.msra.mxu0 0.0
    %1293 = vmatprep.subr.mxu0 0.0
    %1294 = vmatpush1.msra.mxu0 0.0
    %1295 = vmatprep.subr.mxu0 0.0
    %1296 = vmatpush1.msra.mxu0 0.0
    %1297 = vmatprep.subr.mxu0 0.0
    %1298 = vmatpush1.msra.mxu0 0.0
    %1299 = vmatprep.subr.mxu0 0.0
    %1300 = vmatpush1.msra.mxu0 0.0
    %1301 = vmatprep.subr.mxu0 0.0
    %1302 = vmatpush1.msra.mxu0 0.0
    %1303 = vmatprep.subr.mxu0 0.0
    %1304 = vmatpush1.msra.mxu0 0.0
    %1305 = vmatprep.subr.mxu0 0.0
    %1306 = vmatpush1.msra.mxu0 0.0
    %1307 = vmatprep.subr.mxu0 0.0
    %1308 = vmatpush1.msra.mxu0 0.0
    %1309 = vmatprep.subr.mxu0 0.0
    %1310 = vmatpush1.msra.mxu0 0.0
    %1311 = vmatprep.subr.mxu0 0.0
    %1312 = vmatpush1.msra.mxu0 0.0
    %1313 = vmatprep.subr.mxu0 0.0
    %1314 = vmatpush1.msra.mxu0 0.0
    %1315 = vmatprep.subr.mxu0 0.0
    %1316 = vmatpush1.msra.mxu0 0.0
    %1317 = vmatprep.mubr.f32.mxu0 0.0
    %1318 = vmatmul.mubr.f32.gmra.mrb[0].mxu0 %v1249
    %v1319 = vpop.f32.mrb[0].mxu0
    %v1320 = vadd.f32 %v1205, %v1319
    %v1321 = vpop.f32.mrb[0].mxu0
    %1322 = vmatprep.mubr.f32.mxu0 0.0
    %1323 = vmatmul.mubr.f32.gmra.mrb[0].mxu0 %v1251
    %v1324 = vpop.f32.mrb[0].mxu0
    %v1325 = vadd.f32 %v1205, %v1324
    %v1326 = vpop.f32.mrb[0].mxu0
    %1327 = vdwg.mxu0
    %v1330 = vcombine.high %v1320, %v1320
    %v1332 = vunpack.c.l.s4 1983009808
    %v1333 = vunpack.c.0.s8 %v1332
    %v1334 = vlaneseq
    %v1335 = vshrl.u32 %v1334, 7
    %v1336 = vsub.s32 %v1333, %v1335
    %v1337 = vrot.slane %v1320, %v1336
    %v1339 = vunpack.c.l.s4 1983009808
    %v1340 = vunpack.c.0.s8 %v1339
    %v1341 = vlaneseq
    %v1342 = vshrl.u32 %v1341, 7
    %v1343 = vsub.s32 %v1340, %v1342
    %v1344 = vrot.slane %v1330, %v1343
    %v1345 = vcombine.high %v1337, %v1337
    %v1346 = vcombine.high %v1344, %v1344
    %v1347 = vcombine.high %v1325, %v1325
    %v1349 = vunpack.c.l.s4 1983009808
    %v1350 = vunpack.c.0.s8 %v1349
    %v1351 = vlaneseq
    %v1352 = vshrl.u32 %v1351, 7
    %v1353 = vsub.s32 %v1350, %v1352
    %v1354 = vrot.slane %v1325, %v1353
    %v1356 = vunpack.c.l.s4 1983009808
    %v1357 = vunpack.c.0.s8 %v1356
    %v1358 = vlaneseq
    %v1359 = vshrl.u32 %v1358, 7
    %v1360 = vsub.s32 %v1357, %v1359
    %v1361 = vrot.slane %v1347, %v1360
    %v1362 = vcombine.high %v1354, %v1354
    %v1363 = vcombine.high %v1361, %v1361
    %1372 = vmatprep.subr.mxu0 0.0
    %1373 = vmatpush1.msra.mxu0 %v1196
    %1374 = vmatprep.subr.mxu0 0.0
    %1375 = vmatpush1.msra.mxu0 %v1197
    %1376 = vmatprep.subr.mxu0 0.0
    %1377 = vmatpush1.msra.mxu0 %v1198
    %1378 = vmatprep.subr.mxu0 0.0
    %1379 = vmatpush1.msra.mxu0 %v1199
    %1380 = vmatprep.subr.mxu0 0.0
    %1381 = vmatpush1.msra.mxu0 0.0
    %1382 = vmatprep.subr.mxu0 0.0
    %1383 = vmatpush1.msra.mxu0 0.0
    %1384 = vmatprep.subr.mxu0 0.0
    %1385 = vmatpush1.msra.mxu0 0.0
    %1386 = vmatprep.subr.mxu0 0.0
    %1387 = vmatpush1.msra.mxu0 0.0
    %1388 = vmatprep.subr.mxu0 0.0
    %1389 = vmatpush1.msra.mxu0 0.0
    %1390 = vmatprep.subr.mxu0 0.0
    %1391 = vmatpush1.msra.mxu0 0.0
    %1392 = vmatprep.subr.mxu0 0.0
    %1393 = vmatpush1.msra.mxu0 0.0
    %1394 = vmatprep.subr.mxu0 0.0
    %1395 = vmatpush1.msra.mxu0 0.0
    %1396 = vmatprep.subr.mxu0 0.0
    %1397 = vmatpush1.msra.mxu0 0.0
    %1398 = vmatprep.subr.mxu0 0.0
    %1399 = vmatpush1.msra.mxu0 0.0
    %1400 = vmatprep.subr.mxu0 0.0
    %1401 = vmatpush1.msra.mxu0 0.0
    %1402 = vmatprep.subr.mxu0 0.0
    %1403 = vmatpush1.msra.mxu0 0.0
    %1404 = vmatprep.subr.mxu0 0.0
    %1405 = vmatpush1.msra.mxu0 0.0
    %1406 = vmatprep.subr.mxu0 0.0
    %1407 = vmatpush1.msra.mxu0 0.0
    %1408 = vmatprep.subr.mxu0 0.0
    %1409 = vmatpush1.msra.mxu0 0.0
    %1410 = vmatprep.subr.mxu0 0.0
    %1411 = vmatpush1.msra.mxu0 0.0
    %1412 = vmatprep.subr.mxu0 0.0
    %1413 = vmatpush1.msra.mxu0 0.0
    %1414 = vmatprep.subr.mxu0 0.0
    %1415 = vmatpush1.msra.mxu0 0.0
    %1416 = vmatprep.subr.mxu0 0.0
    %1417 = vmatpush1.msra.mxu0 0.0
    %1418 = vmatprep.subr.mxu0 0.0
    %1419 = vmatpush1.msra.mxu0 0.0
    %1420 = vmatprep.subr.mxu0 0.0
    %1421 = vmatpush1.msra.mxu0 0.0
    %1422 = vmatprep.subr.mxu0 0.0
    %1423 = vmatpush1.msra.mxu0 0.0
    %1424 = vmatprep.subr.mxu0 0.0
    %1425 = vmatpush1.msra.mxu0 0.0
    %1426 = vmatprep.subr.mxu0 0.0
    %1427 = vmatpush1.msra.mxu0 0.0
    %1428 = vmatprep.subr.mxu0 0.0
    %1429 = vmatpush1.msra.mxu0 0.0
    %1430 = vmatprep.subr.mxu0 0.0
    %1431 = vmatpush1.msra.mxu0 0.0
    %1432 = vmatprep.subr.mxu0 0.0
    %1433 = vmatpush1.msra.mxu0 0.0
    %1434 = vmatprep.subr.mxu0 0.0
    %1435 = vmatpush1.msra.mxu0 0.0
    %1436 = vmatprep.mubr.f32.mxu0 0.0
    %1437 = vmatmul.mubr.f32.gmra.mrb[0].mxu0 %v304
    %v1438 = vpop.f32.mrb[0].mxu0
    %v1439 = vadd.f32 0.0, %v1438
    %v1440 = vpop.f32.mrb[0].mxu0
    %1441 = vdwg.mxu0
    %v1442 = vadd.f32 %v1337, %v1439
    %v1443 = vxor.u32 %v1442, 2147483648
    %v1444 = vmul.f32 %v1443, 1.442695
    %v1445 = vpow.pop %v1444
    %v1446 = vadd.f32 %v1445, 1.0
    %v1447 = vrcp.pop %v1446
    %v1448 = vmul.f32 1.0, %v1447
    %v1449 = vtanh.pop %v1442
    %v1450 = vmul.f32 %v1448, 0.0
    %1452 = vrot.lane.b32.xlu0 %v1449, 64
    %v1453 = vpop.permute.xlu0 %1452
    %v1455 = vmul.f32 %v1448, %v1453
    %1457 = vrot.lane.b32.xlu0 %v1455, 32
    %v1458 = vpop.permute.xlu0 %1457
    %v1460 = vadd.f32 %v1450, %v1458
    %v1461 = vtanh.pop %v1460
    %1463 = vrot.lane.b32.xlu0 %v1461, 64
    %v1464 = vpop.permute.xlu0 %1463
    %v1466 = vmul.f32 %v1448, %v1464
    %v1469 = vunpack.c.l.s4 1983009808
    %v1470 = vunpack.c.0.s8 %v1469
    %v1471 = vlaneseq
    %v1472 = vshrl.u32 %v1471, 7
    %v1473 = vsub.s32 %v1470, %v1472
    %v1474 = vrot.slane %v1466, %v1473
    %1475 = vrot.lane.b32.xlu0 %v1474, 32
    %v1476 = vpop.permute.xlu0 %1475
    %1478 = vst.msk [vmem:[#allocation2] sm:$0x3] %vm412, %v1476
    %v1479 = vsel %vm302, %v1476, 0
    %1481 = vmatprep.subr.mxu0 0.0
    %1482 = vmatpush1.msra.mxu0 %v1196
    %1483 = vmatprep.subr.mxu0 0.0
    %1484 = vmatpush1.msra.mxu0 %v1197
    %1485 = vmatprep.subr.mxu0 0.0
    %1486 = vmatpush1.msra.mxu0 %v1198
    %1487 = vmatprep.subr.mxu0 0.0
    %1488 = vmatpush1.msra.mxu0 %v1199
    %1489 = vmatprep.subr.mxu0 0.0
    %1490 = vmatpush1.msra.mxu0 0.0
    %1491 = vmatprep.subr.mxu0 0.0
    %1492 = vmatpush1.msra.mxu0 0.0
    %1493 = vmatprep.subr.mxu0 0.0
    %1494 = vmatpush1.msra.mxu0 0.0
    %1495 = vmatprep.subr.mxu0 0.0
    %1496 = vmatpush1.msra.mxu0 0.0
    %1497 = vmatprep.subr.mxu0 0.0
    %1498 = vmatpush1.msra.mxu0 0.0
    %1499 = vmatprep.subr.mxu0 0.0
    %1500 = vmatpush1.msra.mxu0 0.0
    %1501 = vmatprep.subr.mxu0 0.0
    %1502 = vmatpush1.msra.mxu0 0.0
    %1503 = vmatprep.subr.mxu0 0.0
    %1504 = vmatpush1.msra.mxu0 0.0
    %1505 = vmatprep.subr.mxu0 0.0
    %1506 = vmatpush1.msra.mxu0 0.0
    %1507 = vmatprep.subr.mxu0 0.0
    %1508 = vmatpush1.msra.mxu0 0.0
    %1509 = vmatprep.subr.mxu0 0.0
    %1510 = vmatpush1.msra.mxu0 0.0
    %1511 = vmatprep.subr.mxu0 0.0
    %1512 = vmatpush1.msra.mxu0 0.0
    %1513 = vmatprep.subr.mxu0 0.0
    %1514 = vmatpush1.msra.mxu0 0.0
    %1515 = vmatprep.subr.mxu0 0.0
    %1516 = vmatpush1.msra.mxu0 0.0
    %1517 = vmatprep.subr.mxu0 0.0
    %1518 = vmatpush1.msra.mxu0 0.0
    %1519 = vmatprep.subr.mxu0 0.0
    %1520 = vmatpush1.msra.mxu0 0.0
    %1521 = vmatprep.subr.mxu0 0.0
    %1522 = vmatpush1.msra.mxu0 0.0
    %1523 = vmatprep.subr.mxu0 0.0
    %1524 = vmatpush1.msra.mxu0 0.0
    %1525 = vmatprep.subr.mxu0 0.0
    %1526 = vmatpush1.msra.mxu0 0.0
    %1527 = vmatprep.subr.mxu0 0.0
    %1528 = vmatpush1.msra.mxu0 0.0
    %1529 = vmatprep.subr.mxu0 0.0
    %1530 = vmatpush1.msra.mxu0 0.0
    %1531 = vmatprep.subr.mxu0 0.0
    %1532 = vmatpush1.msra.mxu0 0.0
    %1533 = vmatprep.subr.mxu0 0.0
    %1534 = vmatpush1.msra.mxu0 0.0
    %1535 = vmatprep.subr.mxu0 0.0
    %1536 = vmatpush1.msra.mxu0 0.0
    %1537 = vmatprep.subr.mxu0 0.0
    %1538 = vmatpush1.msra.mxu0 0.0
    %1539 = vmatprep.subr.mxu0 0.0
    %1540 = vmatpush1.msra.mxu0 0.0
    %1541 = vmatprep.subr.mxu0 0.0
    %1542 = vmatpush1.msra.mxu0 0.0
    %1543 = vmatprep.subr.mxu0 0.0
    %1544 = vmatpush1.msra.mxu0 0.0
    %1545 = vmatprep.mubr.f32.mxu0 0.0
    %1546 = vmatmul.mubr.f32.gmra.mrb[0].mxu0 %v1479
    %v1547 = vpop.f32.mrb[0].mxu0
    %v1548 = vadd.f32 0.0, %v1547
    %v1549 = vpop.f32.mrb[0].mxu0
    %1550 = vdwg.mxu0
    %v1551 = vadd.f32 %v1345, %v1548
    %v1552 = vxor.u32 %v1551, 2147483648
    %v1553 = vmul.f32 %v1552, 1.442695
    %v1554 = vpow.pop %v1553
    %v1555 = vadd.f32 %v1554, 1.0
    %v1556 = vrcp.pop %v1555
    %v1557 = vmul.f32 1.0, %v1556
    %v1558 = vtanh.pop %v1551
    %v1559 = vmul.f32 %v1557, %v1460
    %1561 = vrot.lane.b32.xlu0 %v1558, 64
    %v1562 = vpop.permute.xlu0 %1561
    %v1564 = vmul.f32 %v1557, %v1562
    %1566 = vrot.lane.b32.xlu0 %v1564, 32
    %v1567 = vpop.permute.xlu0 %1566
    %v1569 = vadd.f32 %v1559, %v1567
    %v1570 = vtanh.pop %v1569
    %1572 = vrot.lane.b32.xlu0 %v1570, 64
    %v1573 = vpop.permute.xlu0 %1572
    %v1575 = vmul.f32 %v1557, %v1573
    %v1578 = vunpack.c.l.s4 1983009808
    %v1579 = vunpack.c.0.s8 %v1578
    %v1580 = vlaneseq
    %v1581 = vshrl.u32 %v1580, 7
    %v1582 = vsub.s32 %v1579, %v1581
    %v1583 = vrot.slane %v1575, %v1582
    %1584 = vrot.lane.b32.xlu0 %v1583, 32
    %v1585 = vpop.permute.xlu0 %1584
    %1587 = vst.msk [vmem:[%s522] sm:$0x3] %vm412, %v1585
    %v1588 = vsel %vm302, %v1585, 0
    %1590 = vmatprep.subr.mxu0 0.0
    %1591 = vmatpush1.msra.mxu0 %v1196
    %1592 = vmatprep.subr.mxu0 0.0
    %1593 = vmatpush1.msra.mxu0 %v1197
    %1594 = vmatprep.subr.mxu0 0.0
    %1595 = vmatpush1.msra.mxu0 %v1198
    %1596 = vmatprep.subr.mxu0 0.0
    %1597 = vmatpush1.msra.mxu0 %v1199
    %1598 = vmatprep.subr.mxu0 0.0
    %1599 = vmatpush1.msra.mxu0 0.0
    %1600 = vmatprep.subr.mxu0 0.0
    %1601 = vmatpush1.msra.mxu0 0.0
    %1602 = vmatprep.subr.mxu0 0.0
    %1603 = vmatpush1.msra.mxu0 0.0
    %1604 = vmatprep.subr.mxu0 0.0
    %1605 = vmatpush1.msra.mxu0 0.0
    %1606 = vmatprep.subr.mxu0 0.0
    %1607 = vmatpush1.msra.mxu0 0.0
    %1608 = vmatprep.subr.mxu0 0.0
    %1609 = vmatpush1.msra.mxu0 0.0
    %1610 = vmatprep.subr.mxu0 0.0
    %1611 = vmatpush1.msra.mxu0 0.0
    %1612 = vmatprep.subr.mxu0 0.0
    %1613 = vmatpush1.msra.mxu0 0.0
    %1614 = vmatprep.subr.mxu0 0.0
    %1615 = vmatpush1.msra.mxu0 0.0
    %1616 = vmatprep.subr.mxu0 0.0
    %1617 = vmatpush1.msra.mxu0 0.0
    %1618 = vmatprep.subr.mxu0 0.0
    %1619 = vmatpush1.msra.mxu0 0.0
    %1620 = vmatprep.subr.mxu0 0.0
    %1621 = vmatpush1.msra.mxu0 0.0
    %1622 = vmatprep.subr.mxu0 0.0
    %1623 = vmatpush1.msra.mxu0 0.0
    %1624 = vmatprep.subr.mxu0 0.0
    %1625 = vmatpush1.msra.mxu0 0.0
    %1626 = vmatprep.subr.mxu0 0.0
    %1627 = vmatpush1.msra.mxu0 0.0
    %1628 = vmatprep.subr.mxu0 0.0
    %1629 = vmatpush1.msra.mxu0 0.0
    %1630 = vmatprep.subr.mxu0 0.0
    %1631 = vmatpush1.msra.mxu0 0.0
    %1632 = vmatprep.subr.mxu0 0.0
    %1633 = vmatpush1.msra.mxu0 0.0
    %1634 = vmatprep.subr.mxu0 0.0
    %1635 = vmatpush1.msra.mxu0 0.0
    %1636 = vmatprep.subr.mxu0 0.0
    %1637 = vmatpush1.msra.mxu0 0.0
    %1638 = vmatprep.subr.mxu0 0.0
    %1639 = vmatpush1.msra.mxu0 0.0
    %1640 = vmatprep.subr.mxu0 0.0
    %1641 = vmatpush1.msra.mxu0 0.0
    %1642 = vmatprep.subr.mxu0 0.0
    %1643 = vmatpush1.msra.mxu0 0.0
    %1644 = vmatprep.subr.mxu0 0.0
    %1645 = vmatpush1.msra.mxu0 0.0
    %1646 = vmatprep.subr.mxu0 0.0
    %1647 = vmatpush1.msra.mxu0 0.0
    %1648 = vmatprep.subr.mxu0 0.0
    %1649 = vmatpush1.msra.mxu0 0.0
    %1650 = vmatprep.subr.mxu0 0.0
    %1651 = vmatpush1.msra.mxu0 0.0
    %1652 = vmatprep.subr.mxu0 0.0
    %1653 = vmatpush1.msra.mxu0 0.0
    %1654 = vmatprep.mubr.f32.mxu0 0.0
    %1655 = vmatmul.mubr.f32.gmra.mrb[0].mxu0 %v1588
    %v1656 = vpop.f32.mrb[0].mxu0
    %v1657 = vadd.f32 0.0, %v1656
    %v1658 = vpop.f32.mrb[0].mxu0
    %1659 = vdwg.mxu0
    %v1660 = vadd.f32 %v1344, %v1657
    %v1661 = vxor.u32 %v1660, 2147483648
    %v1662 = vmul.f32 %v1661, 1.442695
    %v1663 = vpow.pop %v1662
    %v1664 = vadd.f32 %v1663, 1.0
    %v1665 = vrcp.pop %v1664
    %v1666 = vmul.f32 1.0, %v1665
    %v1667 = vtanh.pop %v1660
    %v1668 = vmul.f32 %v1666, %v1569
    %1670 = vrot.lane.b32.xlu0 %v1667, 64
    %v1671 = vpop.permute.xlu0 %1670
    %v1673 = vmul.f32 %v1666, %v1671
    %1675 = vrot.lane.b32.xlu0 %v1673, 32
    %v1676 = vpop.permute.xlu0 %1675
    %v1678 = vadd.f32 %v1668, %v1676
    %v1679 = vtanh.pop %v1678
    %1681 = vrot.lane.b32.xlu0 %v1679, 64
    %v1682 = vpop.permute.xlu0 %1681
    %v1684 = vmul.f32 %v1666, %v1682
    %v1687 = vunpack.c.l.s4 1983009808
    %v1688 = vunpack.c.0.s8 %v1687
    %v1689 = vlaneseq
    %v1690 = vshrl.u32 %v1689, 7
    %v1691 = vsub.s32 %v1688, %v1690
    %v1692 = vrot.slane %v1684, %v1691
    %1693 = vrot.lane.b32.xlu0 %v1692, 32
    %v1694 = vpop.permute.xlu0 %1693
    %1696 = vst.msk [vmem:[%s632] sm:$0x3] %vm412, %v1694
    %v1697 = vsel %vm302, %v1694, 0
    %1699 = vmatprep.subr.mxu0 0.0
    %1700 = vmatpush1.msra.mxu0 %v1196
    %1701 = vmatprep.subr.mxu0 0.0
    %1702 = vmatpush1.msra.mxu0 %v1197
    %1703 = vmatprep.subr.mxu0 0.0
    %1704 = vmatpush1.msra.mxu0 %v1198
    %1705 = vmatprep.subr.mxu0 0.0
    %1706 = vmatpush1.msra.mxu0 %v1199
    %1707 = vmatprep.subr.mxu0 0.0
    %1708 = vmatpush1.msra.mxu0 0.0
    %1709 = vmatprep.subr.mxu0 0.0
    %1710 = vmatpush1.msra.mxu0 0.0
    %1711 = vmatprep.subr.mxu0 0.0
    %1712 = vmatpush1.msra.mxu0 0.0
    %1713 = vmatprep.subr.mxu0 0.0
    %1714 = vmatpush1.msra.mxu0 0.0
    %1715 = vmatprep.subr.mxu0 0.0
    %1716 = vmatpush1.msra.mxu0 0.0
    %1717 = vmatprep.subr.mxu0 0.0
    %1718 = vmatpush1.msra.mxu0 0.0
    %1719 = vmatprep.subr.mxu0 0.0
    %1720 = vmatpush1.msra.mxu0 0.0
    %1721 = vmatprep.subr.mxu0 0.0
    %1722 = vmatpush1.msra.mxu0 0.0
    %1723 = vmatprep.subr.mxu0 0.0
    %1724 = vmatpush1.msra.mxu0 0.0
    %1725 = vmatprep.subr.mxu0 0.0
    %1726 = vmatpush1.msra.mxu0 0.0
    %1727 = vmatprep.subr.mxu0 0.0
    %1728 = vmatpush1.msra.mxu0 0.0
    %1729 = vmatprep.subr.mxu0 0.0
    %1730 = vmatpush1.msra.mxu0 0.0
    %1731 = vmatprep.subr.mxu0 0.0
    %1732 = vmatpush1.msra.mxu0 0.0
    %1733 = vmatprep.subr.mxu0 0.0
    %1734 = vmatpush1.msra.mxu0 0.0
    %1735 = vmatprep.subr.mxu0 0.0
    %1736 = vmatpush1.msra.mxu0 0.0
    %1737 = vmatprep.subr.mxu0 0.0
    %1738 = vmatpush1.msra.mxu0 0.0
    %1739 = vmatprep.subr.mxu0 0.0
    %1740 = vmatpush1.msra.mxu0 0.0
    %1741 = vmatprep.subr.mxu0 0.0
    %1742 = vmatpush1.msra.mxu0 0.0
    %1743 = vmatprep.subr.mxu0 0.0
    %1744 = vmatpush1.msra.mxu0 0.0
    %1745 = vmatprep.subr.mxu0 0.0
    %1746 = vmatpush1.msra.mxu0 0.0
    %1747 = vmatprep.subr.mxu0 0.0
    %1748 = vmatpush1.msra.mxu0 0.0
    %1749 = vmatprep.subr.mxu0 0.0
    %1750 = vmatpush1.msra.mxu0 0.0
    %1751 = vmatprep.subr.mxu0 0.0
    %1752 = vmatpush1.msra.mxu0 0.0
    %1753 = vmatprep.subr.mxu0 0.0
    %1754 = vmatpush1.msra.mxu0 0.0
    %1755 = vmatprep.subr.mxu0 0.0
    %1756 = vmatpush1.msra.mxu0 0.0
    %1757 = vmatprep.subr.mxu0 0.0
    %1758 = vmatpush1.msra.mxu0 0.0
    %1759 = vmatprep.subr.mxu0 0.0
    %1760 = vmatpush1.msra.mxu0 0.0
    %1761 = vmatprep.subr.mxu0 0.0
    %1762 = vmatpush1.msra.mxu0 0.0
    %1763 = vmatprep.mubr.f32.mxu0 0.0
    %1764 = vmatmul.mubr.f32.gmra.mrb[0].mxu0 %v1697
    %v1765 = vpop.f32.mrb[0].mxu0
    %v1766 = vadd.f32 0.0, %v1765
    %v1767 = vpop.f32.mrb[0].mxu0
    %1768 = vdwg.mxu0
    %v1769 = vadd.f32 %v1346, %v1766
    %v1770 = vxor.u32 %v1769, 2147483648
    %v1771 = vmul.f32 %v1770, 1.442695
    %v1772 = vpow.pop %v1771
    %v1773 = vadd.f32 %v1772, 1.0
    %v1774 = vrcp.pop %v1773
    %v1775 = vmul.f32 1.0, %v1774
    %v1776 = vtanh.pop %v1769
    %v1777 = vmul.f32 %v1775, %v1678
    %1779 = vrot.lane.b32.xlu0 %v1776, 64
    %v1780 = vpop.permute.xlu0 %1779
    %v1782 = vmul.f32 %v1775, %v1780
    %1784 = vrot.lane.b32.xlu0 %v1782, 32
    %v1785 = vpop.permute.xlu0 %1784
    %v1787 = vadd.f32 %v1777, %v1785
    %v1788 = vtanh.pop %v1787
    %1790 = vrot.lane.b32.xlu0 %v1788, 64
    %v1791 = vpop.permute.xlu0 %1790
    %v1793 = vmul.f32 %v1775, %v1791
    %v1796 = vunpack.c.l.s4 1983009808
    %v1797 = vunpack.c.0.s8 %v1796
    %v1798 = vlaneseq
    %v1799 = vshrl.u32 %v1798, 7
    %v1800 = vsub.s32 %v1797, %v1799
    %v1801 = vrot.slane %v1793, %v1800
    %1802 = vrot.lane.b32.xlu0 %v1801, 32
    %v1803 = vpop.permute.xlu0 %1802
    %1805 = vst.msk [vmem:[%s742] sm:$0x3] %vm412, %v1803
    %v1806 = vsel %vm302, %v1803, 0
    %1808 = vmatprep.subr.mxu0 0.0
    %1809 = vmatpush1.msra.mxu0 %v1196
    %1810 = vmatprep.subr.mxu0 0.0
    %1811 = vmatpush1.msra.mxu0 %v1197
    %1812 = vmatprep.subr.mxu0 0.0
    %1813 = vmatpush1.msra.mxu0 %v1198
    %1814 = vmatprep.subr.mxu0 0.0
    %1815 = vmatpush1.msra.mxu0 %v1199
    %1816 = vmatprep.subr.mxu0 0.0
    %1817 = vmatpush1.msra.mxu0 0.0
    %1818 = vmatprep.subr.mxu0 0.0
    %1819 = vmatpush1.msra.mxu0 0.0
    %1820 = vmatprep.subr.mxu0 0.0
    %1821 = vmatpush1.msra.mxu0 0.0
    %1822 = vmatprep.subr.mxu0 0.0
    %1823 = vmatpush1.msra.mxu0 0.0
    %1824 = vmatprep.subr.mxu0 0.0
    %1825 = vmatpush1.msra.mxu0 0.0
    %1826 = vmatprep.subr.mxu0 0.0
    %1827 = vmatpush1.msra.mxu0 0.0
    %1828 = vmatprep.subr.mxu0 0.0
    %1829 = vmatpush1.msra.mxu0 0.0
    %1830 = vmatprep.subr.mxu0 0.0
    %1831 = vmatpush1.msra.mxu0 0.0
    %1832 = vmatprep.subr.mxu0 0.0
    %1833 = vmatpush1.msra.mxu0 0.0
    %1834 = vmatprep.subr.mxu0 0.0
    %1835 = vmatpush1.msra.mxu0 0.0
    %1836 = vmatprep.subr.mxu0 0.0
    %1837 = vmatpush1.msra.mxu0 0.0
    %1838 = vmatprep.subr.mxu0 0.0
    %1839 = vmatpush1.msra.mxu0 0.0
    %1840 = vmatprep.subr.mxu0 0.0
    %1841 = vmatpush1.msra.mxu0 0.0
    %1842 = vmatprep.subr.mxu0 0.0
    %1843 = vmatpush1.msra.mxu0 0.0
    %1844 = vmatprep.subr.mxu0 0.0
    %1845 = vmatpush1.msra.mxu0 0.0
    %1846 = vmatprep.subr.mxu0 0.0
    %1847 = vmatpush1.msra.mxu0 0.0
    %1848 = vmatprep.subr.mxu0 0.0
    %1849 = vmatpush1.msra.mxu0 0.0
    %1850 = vmatprep.subr.mxu0 0.0
    %1851 = vmatpush1.msra.mxu0 0.0
    %1852 = vmatprep.subr.mxu0 0.0
    %1853 = vmatpush1.msra.mxu0 0.0
    %1854 = vmatprep.subr.mxu0 0.0
    %1855 = vmatpush1.msra.mxu0 0.0
    %1856 = vmatprep.subr.mxu0 0.0
    %1857 = vmatpush1.msra.mxu0 0.0
    %1858 = vmatprep.subr.mxu0 0.0
    %1859 = vmatpush1.msra.mxu0 0.0
    %1860 = vmatprep.subr.mxu0 0.0
    %1861 = vmatpush1.msra.mxu0 0.0
    %1862 = vmatprep.subr.mxu0 0.0
    %1863 = vmatpush1.msra.mxu0 0.0
    %1864 = vmatprep.subr.mxu0 0.0
    %1865 = vmatpush1.msra.mxu0 0.0
    %1866 = vmatprep.subr.mxu0 0.0
    %1867 = vmatpush1.msra.mxu0 0.0
    %1868 = vmatprep.subr.mxu0 0.0
    %1869 = vmatpush1.msra.mxu0 0.0
    %1870 = vmatprep.subr.mxu0 0.0
    %1871 = vmatpush1.msra.mxu0 0.0
    %1872 = vmatprep.mubr.f32.mxu0 0.0
    %1873 = vmatmul.mubr.f32.gmra.mrb[0].mxu0 %v1806
    %v1874 = vpop.f32.mrb[0].mxu0
    %v1875 = vadd.f32 0.0, %v1874
    %v1876 = vpop.f32.mrb[0].mxu0
    %1877 = vdwg.mxu0
    %v1878 = vadd.f32 %v1354, %v1875
    %v1879 = vxor.u32 %v1878, 2147483648
    %v1880 = vmul.f32 %v1879, 1.442695
    %v1881 = vpow.pop %v1880
    %v1882 = vadd.f32 %v1881, 1.0
    %v1883 = vrcp.pop %v1882
    %v1884 = vmul.f32 1.0, %v1883
    %v1885 = vtanh.pop %v1878
    %v1886 = vmul.f32 %v1884, %v1787
    %1888 = vrot.lane.b32.xlu0 %v1885, 64
    %v1889 = vpop.permute.xlu0 %1888
    %v1891 = vmul.f32 %v1884, %v1889
    %1893 = vrot.lane.b32.xlu0 %v1891, 32
    %v1894 = vpop.permute.xlu0 %1893
    %v1896 = vadd.f32 %v1886, %v1894
    %v1897 = vtanh.pop %v1896
    %1899 = vrot.lane.b32.xlu0 %v1897, 64
    %v1900 = vpop.permute.xlu0 %1899
    %v1902 = vmul.f32 %v1884, %v1900
    %v1905 = vunpack.c.l.s4 1983009808
    %v1906 = vunpack.c.0.s8 %v1905
    %v1907 = vlaneseq
    %v1908 = vshrl.u32 %v1907, 7
    %v1909 = vsub.s32 %v1906, %v1908
    %v1910 = vrot.slane %v1902, %v1909
    %1911 = vrot.lane.b32.xlu0 %v1910, 32
    %v1912 = vpop.permute.xlu0 %1911
    %1914 = vst.msk [vmem:[%s852] sm:$0x3] %vm412, %v1912
    %v1915 = vsel %vm302, %v1912, 0
    %1917 = vmatprep.subr.mxu0 0.0
    %1918 = vmatpush1.msra.mxu0 %v1196
    %1919 = vmatprep.subr.mxu0 0.0
    %1920 = vmatpush1.msra.mxu0 %v1197
    %1921 = vmatprep.subr.mxu0 0.0
    %1922 = vmatpush1.msra.mxu0 %v1198
    %1923 = vmatprep.subr.mxu0 0.0
    %1924 = vmatpush1.msra.mxu0 %v1199
    %1925 = vmatprep.subr.mxu0 0.0
    %1926 = vmatpush1.msra.mxu0 0.0
    %1927 = vmatprep.subr.mxu0 0.0
    %1928 = vmatpush1.msra.mxu0 0.0
    %1929 = vmatprep.subr.mxu0 0.0
    %1930 = vmatpush1.msra.mxu0 0.0
    %1931 = vmatprep.subr.mxu0 0.0
    %1932 = vmatpush1.msra.mxu0 0.0
    %1933 = vmatprep.subr.mxu0 0.0
    %1934 = vmatpush1.msra.mxu0 0.0
    %1935 = vmatprep.subr.mxu0 0.0
    %1936 = vmatpush1.msra.mxu0 0.0
    %1937 = vmatprep.subr.mxu0 0.0
    %1938 = vmatpush1.msra.mxu0 0.0
    %1939 = vmatprep.subr.mxu0 0.0
    %1940 = vmatpush1.msra.mxu0 0.0
    %1941 = vmatprep.subr.mxu0 0.0
    %1942 = vmatpush1.msra.mxu0 0.0
    %1943 = vmatprep.subr.mxu0 0.0
    %1944 = vmatpush1.msra.mxu0 0.0
    %1945 = vmatprep.subr.mxu0 0.0
    %1946 = vmatpush1.msra.mxu0 0.0
    %1947 = vmatprep.subr.mxu0 0.0
    %1948 = vmatpush1.msra.mxu0 0.0
    %1949 = vmatprep.subr.mxu0 0.0
    %1950 = vmatpush1.msra.mxu0 0.0
    %1951 = vmatprep.subr.mxu0 0.0
    %1952 = vmatpush1.msra.mxu0 0.0
    %1953 = vmatprep.subr.mxu0 0.0
    %1954 = vmatpush1.msra.mxu0 0.0
    %1955 = vmatprep.subr.mxu0 0.0
    %1956 = vmatpush1.msra.mxu0 0.0
    %1957 = vmatprep.subr.mxu0 0.0
    %1958 = vmatpush1.msra.mxu0 0.0
    %1959 = vmatprep.subr.mxu0 0.0
    %1960 = vmatpush1.msra.mxu0 0.0
    %1961 = vmatprep.subr.mxu0 0.0
    %1962 = vmatpush1.msra.mxu0 0.0
    %1963 = vmatprep.subr.mxu0 0.0
    %1964 = vmatpush1.msra.mxu0 0.0
    %1965 = vmatprep.subr.mxu0 0.0
    %1966 = vmatpush1.msra.mxu0 0.0
    %1967 = vmatprep.subr.mxu0 0.0
    %1968 = vmatpush1.msra.mxu0 0.0
    %1969 = vmatprep.subr.mxu0 0.0
    %1970 = vmatpush1.msra.mxu0 0.0
    %1971 = vmatprep.subr.mxu0 0.0
    %1972 = vmatpush1.msra.mxu0 0.0
    %1973 = vmatprep.subr.mxu0 0.0
    %1974 = vmatpush1.msra.mxu0 0.0
    %1975 = vmatprep.subr.mxu0 0.0
    %1976 = vmatpush1.msra.mxu0 0.0
    %1977 = vmatprep.subr.mxu0 0.0
    %1978 = vmatpush1.msra.mxu0 0.0
    %1979 = vmatprep.subr.mxu0 0.0
    %1980 = vmatpush1.msra.mxu0 0.0
    %1981 = vmatprep.mubr.f32.mxu0 0.0
    %1982 = vmatmul.mubr.f32.gmra.mrb[0].mxu0 %v1915
    %v1983 = vpop.f32.mrb[0].mxu0
    %v1984 = vadd.f32 0.0, %v1983
    %v1985 = vpop.f32.mrb[0].mxu0
    %1986 = vdwg.mxu0
    %v1987 = vadd.f32 %v1362, %v1984
    %v1988 = vxor.u32 %v1987, 2147483648
    %v1989 = vmul.f32 %v1988, 1.442695
    %v1990 = vpow.pop %v1989
    %v1991 = vadd.f32 %v1990, 1.0
    %v1992 = vrcp.pop %v1991
    %v1993 = vmul.f32 1.0, %v1992
    %v1994 = vtanh.pop %v1987
    %v1995 = vmul.f32 %v1993, %v1896
    %1997 = vrot.lane.b32.xlu0 %v1994, 64
    %v1998 = vpop.permute.xlu0 %1997
    %v2000 = vmul.f32 %v1993, %v1998
    %2002 = vrot.lane.b32.xlu0 %v2000, 32
    %v2003 = vpop.permute.xlu0 %2002
    %v2005 = vadd.f32 %v1995, %v2003
    %v2006 = vtanh.pop %v2005
    %2008 = vrot.lane.b32.xlu0 %v2006, 64
    %v2009 = vpop.permute.xlu0 %2008
    %v2011 = vmul.f32 %v1993, %v2009
    %v2014 = vunpack.c.l.s4 1983009808
    %v2015 = vunpack.c.0.s8 %v2014
    %v2016 = vlaneseq
    %v2017 = vshrl.u32 %v2016, 7
    %v2018 = vsub.s32 %v2015, %v2017
    %v2019 = vrot.slane %v2011, %v2018
    %2020 = vrot.lane.b32.xlu0 %v2019, 32
    %v2021 = vpop.permute.xlu0 %2020
    %2023 = vst.msk [vmem:[%s962] sm:$0x3] %vm412, %v2021
    %v2024 = vsel %vm302, %v2021, 0
    %2026 = vmatprep.subr.mxu0 0.0
    %2027 = vmatpush1.msra.mxu0 %v1196
    %2028 = vmatprep.subr.mxu0 0.0
    %2029 = vmatpush1.msra.mxu0 %v1197
    %2030 = vmatprep.subr.mxu0 0.0
    %2031 = vmatpush1.msra.mxu0 %v1198
    %2032 = vmatprep.subr.mxu0 0.0
    %2033 = vmatpush1.msra.mxu0 %v1199
    %2034 = vmatprep.subr.mxu0 0.0
    %2035 = vmatpush1.msra.mxu0 0.0
    %2036 = vmatprep.subr.mxu0 0.0
    %2037 = vmatpush1.msra.mxu0 0.0
    %2038 = vmatprep.subr.mxu0 0.0
    %2039 = vmatpush1.msra.mxu0 0.0
    %2040 = vmatprep.subr.mxu0 0.0
    %2041 = vmatpush1.msra.mxu0 0.0
    %2042 = vmatprep.subr.mxu0 0.0
    %2043 = vmatpush1.msra.mxu0 0.0
    %2044 = vmatprep.subr.mxu0 0.0
    %2045 = vmatpush1.msra.mxu0 0.0
    %2046 = vmatprep.subr.mxu0 0.0
    %2047 = vmatpush1.msra.mxu0 0.0
    %2048 = vmatprep.subr.mxu0 0.0
    %2049 = vmatpush1.msra.mxu0 0.0
    %2050 = vmatprep.subr.mxu0 0.0
    %2051 = vmatpush1.msra.mxu0 0.0
    %2052 = vmatprep.subr.mxu0 0.0
    %2053 = vmatpush1.msra.mxu0 0.0
    %2054 = vmatprep.subr.mxu0 0.0
    %2055 = vmatpush1.msra.mxu0 0.0
    %2056 = vmatprep.subr.mxu0 0.0
    %2057 = vmatpush1.msra.mxu0 0.0
    %2058 = vmatprep.subr.mxu0 0.0
    %2059 = vmatpush1.msra.mxu0 0.0
    %2060 = vmatprep.subr.mxu0 0.0
    %2061 = vmatpush1.msra.mxu0 0.0
    %2062 = vmatprep.subr.mxu0 0.0
    %2063 = vmatpush1.msra.mxu0 0.0
    %2064 = vmatprep.subr.mxu0 0.0
    %2065 = vmatpush1.msra.mxu0 0.0
    %2066 = vmatprep.subr.mxu0 0.0
    %2067 = vmatpush1.msra.mxu0 0.0
    %2068 = vmatprep.subr.mxu0 0.0
    %2069 = vmatpush1.msra.mxu0 0.0
    %2070 = vmatprep.subr.mxu0 0.0
    %2071 = vmatpush1.msra.mxu0 0.0
    %2072 = vmatprep.subr.mxu0 0.0
    %2073 = vmatpush1.msra.mxu0 0.0
    %2074 = vmatprep.subr.mxu0 0.0
    %2075 = vmatpush1.msra.mxu0 0.0
    %2076 = vmatprep.subr.mxu0 0.0
    %2077 = vmatpush1.msra.mxu0 0.0
    %2078 = vmatprep.subr.mxu0 0.0
    %2079 = vmatpush1.msra.mxu0 0.0
    %2080 = vmatprep.subr.mxu0 0.0
    %2081 = vmatpush1.msra.mxu0 0.0
    %2082 = vmatprep.subr.mxu0 0.0
    %2083 = vmatpush1.msra.mxu0 0.0
    %2084 = vmatprep.subr.mxu0 0.0
    %2085 = vmatpush1.msra.mxu0 0.0
    %2086 = vmatprep.subr.mxu0 0.0
    %2087 = vmatpush1.msra.mxu0 0.0
    %2088 = vmatprep.subr.mxu0 0.0
    %2089 = vmatpush1.msra.mxu0 0.0
    %2090 = vmatprep.mubr.f32.mxu0 0.0
    %2091 = vmatmul.mubr.f32.gmra.mrb[0].mxu0 %v2024
    %v2092 = vpop.f32.mrb[0].mxu0
    %v2093 = vadd.f32 0.0, %v2092
    %v2094 = vpop.f32.mrb[0].mxu0
    %2095 = vdwg.mxu0
    %v2096 = vadd.f32 %v1361, %v2093
    %v2097 = vxor.u32 %v2096, 2147483648
    %v2098 = vmul.f32 %v2097, 1.442695
    %v2099 = vpow.pop %v2098
    %v2100 = vadd.f32 %v2099, 1.0
    %v2101 = vrcp.pop %v2100
    %v2102 = vmul.f32 1.0, %v2101
    %v2103 = vtanh.pop %v2096
    %v2104 = vmul.f32 %v2102, %v2005
    %2106 = vrot.lane.b32.xlu0 %v2103, 64
    %v2107 = vpop.permute.xlu0 %2106
    %v2109 = vmul.f32 %v2102, %v2107
    %2111 = vrot.lane.b32.xlu0 %v2109, 32
    %v2112 = vpop.permute.xlu0 %2111
    %v2114 = vadd.f32 %v2104, %v2112
    %v2115 = vtanh.pop %v2114
    %2117 = vrot.lane.b32.xlu0 %v2115, 64
    %v2118 = vpop.permute.xlu0 %2117
    %v2120 = vmul.f32 %v2102, %v2118
    %v2123 = vunpack.c.l.s4 1983009808
    %v2124 = vunpack.c.0.s8 %v2123
    %v2125 = vlaneseq
    %v2126 = vshrl.u32 %v2125, 7
    %v2127 = vsub.s32 %v2124, %v2126
    %v2128 = vrot.slane %v2120, %v2127
    %2129 = vrot.lane.b32.xlu0 %v2128, 32
    %v2130 = vpop.permute.xlu0 %2129
    %2132 = vst.msk [vmem:[%s1072] sm:$0x3] %vm412, %v2130
    %v2133 = vsel %vm302, %v2130, 0
    %2135 = vmatprep.subr.mxu0 0.0
    %2136 = vmatpush1.msra.mxu0 %v1196
    %2137 = vmatprep.subr.mxu0 0.0
    %2138 = vmatpush1.msra.mxu0 %v1197
    %2139 = vmatprep.subr.mxu0 0.0
    %2140 = vmatpush1.msra.mxu0 %v1198
    %2141 = vmatprep.subr.mxu0 0.0
    %2142 = vmatpush1.msra.mxu0 %v1199
    %2143 = vmatprep.subr.mxu0 0.0
    %2144 = vmatpush1.msra.mxu0 0.0
    %2145 = vmatprep.subr.mxu0 0.0
    %2146 = vmatpush1.msra.mxu0 0.0
    %2147 = vmatprep.subr.mxu0 0.0
    %2148 = vmatpush1.msra.mxu0 0.0
    %2149 = vmatprep.subr.mxu0 0.0
    %2150 = vmatpush1.msra.mxu0 0.0
    %2151 = vmatprep.subr.mxu0 0.0
    %2152 = vmatpush1.msra.mxu0 0.0
    %2153 = vmatprep.subr.mxu0 0.0
    %2154 = vmatpush1.msra.mxu0 0.0
    %2155 = vmatprep.subr.mxu0 0.0
    %2156 = vmatpush1.msra.mxu0 0.0
    %2157 = vmatprep.subr.mxu0 0.0
    %2158 = vmatpush1.msra.mxu0 0.0
    %2159 = vmatprep.subr.mxu0 0.0
    %2160 = vmatpush1.msra.mxu0 0.0
    %2161 = vmatprep.subr.mxu0 0.0
    %2162 = vmatpush1.msra.mxu0 0.0
    %2163 = vmatprep.subr.mxu0 0.0
    %2164 = vmatpush1.msra.mxu0 0.0
    %2165 = vmatprep.subr.mxu0 0.0
    %2166 = vmatpush1.msra.mxu0 0.0
    %2167 = vmatprep.subr.mxu0 0.0
    %2168 = vmatpush1.msra.mxu0 0.0
    %2169 = vmatprep.subr.mxu0 0.0
    %2170 = vmatpush1.msra.mxu0 0.0
    %2171 = vmatprep.subr.mxu0 0.0
    %2172 = vmatpush1.msra.mxu0 0.0
    %2173 = vmatprep.subr.mxu0 0.0
    %2174 = vmatpush1.msra.mxu0 0.0
    %2175 = vmatprep.subr.mxu0 0.0
    %2176 = vmatpush1.msra.mxu0 0.0
    %2177 = vmatprep.subr.mxu0 0.0
    %2178 = vmatpush1.msra.mxu0 0.0
    %2179 = vmatprep.subr.mxu0 0.0
    %2180 = vmatpush1.msra.mxu0 0.0
    %2181 = vmatprep.subr.mxu0 0.0
    %2182 = vmatpush1.msra.mxu0 0.0
    %2183 = vmatprep.subr.mxu0 0.0
    %2184 = vmatpush1.msra.mxu0 0.0
    %2185 = vmatprep.subr.mxu0 0.0
    %2186 = vmatpush1.msra.mxu0 0.0
    %2187 = vmatprep.subr.mxu0 0.0
    %2188 = vmatpush1.msra.mxu0 0.0
    %2189 = vmatprep.subr.mxu0 0.0
    %2190 = vmatpush1.msra.mxu0 0.0
    %2191 = vmatprep.subr.mxu0 0.0
    %2192 = vmatpush1.msra.mxu0 0.0
    %2193 = vmatprep.subr.mxu0 0.0
    %2194 = vmatpush1.msra.mxu0 0.0
    %2195 = vmatprep.subr.mxu0 0.0
    %2196 = vmatpush1.msra.mxu0 0.0
    %2197 = vmatprep.subr.mxu0 0.0
    %2198 = vmatpush1.msra.mxu0 0.0
    %2199 = vmatprep.mubr.f32.mxu0 0.0
    %2200 = vmatmul.mubr.f32.gmra.mrb[0].mxu0 %v2133
    %v2201 = vpop.f32.mrb[0].mxu0
    %v2202 = vadd.f32 0.0, %v2201
    %v2203 = vpop.f32.mrb[0].mxu0
    %2204 = vdwg.mxu0
    %v2205 = vadd.f32 %v1363, %v2202
    %v2206 = vxor.u32 %v2205, 2147483648
    %v2207 = vmul.f32 %v2206, 1.442695
    %v2208 = vpow.pop %v2207
    %v2209 = vadd.f32 %v2208, 1.0
    %v2210 = vrcp.pop %v2209
    %v2211 = vmul.f32 1.0, %v2210
    %v2212 = vtanh.pop %v2205
    %v2213 = vmul.f32 %v2211, %v2114
    %2215 = vrot.lane.b32.xlu0 %v2212, 64
    %v2216 = vpop.permute.xlu0 %2215
    %v2218 = vmul.f32 %v2211, %v2216
    %2220 = vrot.lane.b32.xlu0 %v2218, 32
    %v2221 = vpop.permute.xlu0 %2220
    %v2223 = vadd.f32 %v2213, %v2221
    %v2224 = vtanh.pop %v2223
    %2226 = vrot.lane.b32.xlu0 %v2224, 64
    %v2227 = vpop.permute.xlu0 %2226
    %v2229 = vmul.f32 %v2211, %v2227
    %v2232 = vunpack.c.l.s4 1983009808
    %v2233 = vunpack.c.0.s8 %v2232
    %v2234 = vlaneseq
    %v2235 = vshrl.u32 %v2234, 7
    %v2236 = vsub.s32 %v2233, %v2235
    %v2237 = vrot.slane %v2229, %v2236
    %2238 = vrot.lane.b32.xlu0 %v2237, 32
    %v2239 = vpop.permute.xlu0 %2238
    %2241 = vst.msk [vmem:[%s1182] sm:$0x3] %vm412, %v2239
    %v2242 = vld [vmem:[#allocation2] sm:$0x3]
    %v2243 = vld [vmem:[#allocation2 + $0x2] sm:$0x3]
    %v2244 = vld [vmem:[#allocation2 + $0x4] sm:$0x3]
    %v2245 = vld [vmem:[#allocation2 + $0x6] sm:$0x3]
    %v2246 = vld [vmem:[#allocation2 + $0x8] sm:$0x3]
    %v2247 = vld [vmem:[#allocation2 + $0xa] sm:$0x3]
    %v2248 = vld [vmem:[#allocation2 + $0xc] sm:$0x3]
    %v2249 = vld [vmem:[#allocation2 + $0xe] sm:$0x3]
    %v2250 = vld [vmem:[#allocation12] sm:$0xff]
    %v2251 = vld [vmem:[#allocation12 + $0x8] sm:$0xff]
    %v2252 = vld [vmem:[#allocation12 + $0x10] sm:$0xff]
    %v2253 = vld [vmem:[#allocation12 + $0x18] sm:$0xff]
    %v2254 = vld [vmem:[%s8] sm:$0x1]
    %v2256 = vlaneseq
    %v2257 = vshrl.u32 %v2256, 7
    %v2258 = vsub.s32 0, %v2257
    %v2259 = vrot.slane %v2254, %v2258
    %v2269 = vcombine.low %v2242, %v2243
    %v2270 = vcombine.low %v2244, %v2245
    %v2272 = vunpack.c.l.s4 1983009808
    %v2273 = vunpack.c.0.s8 %v2272
    %v2274 = vlaneseq
    %v2275 = vshrl.u32 %v2274, 7
    %v2276 = vsub.s32 %v2273, %v2275
    %v2277 = vrot.slane %v2269, %v2276
    %v2279 = vunpack.c.l.s4 1983009808
    %v2280 = vunpack.c.0.s8 %v2279
    %v2281 = vlaneseq
    %v2282 = vshrl.u32 %v2281, 7
    %v2283 = vsub.s32 %v2280, %v2282
    %v2284 = vrot.slane %v2270, %v2283
    %v2285 = vcombine.low %v2277, %v2284
    %v2286 = vcombine.low %v2246, %v2247
    %v2287 = vcombine.low %v2248, %v2249
    %v2289 = vunpack.c.l.s4 1983009808
    %v2290 = vunpack.c.0.s8 %v2289
    %v2291 = vlaneseq
    %v2292 = vshrl.u32 %v2291, 7
    %v2293 = vsub.s32 %v2290, %v2292
    %v2294 = vrot.slane %v2286, %v2293
    %v2296 = vunpack.c.l.s4 1983009808
    %v2297 = vunpack.c.0.s8 %v2296
    %v2298 = vlaneseq
    %v2299 = vshrl.u32 %v2298, 7
    %v2300 = vsub.s32 %v2297, %v2299
    %v2301 = vrot.slane %v2287, %v2300
    %v2302 = vcombine.low %v2294, %v2301
    %v2303 = vsel %vm302, %v2285, 0
    %v2305 = vsel %vm302, %v2302, 0
    %2307 = vmatprep.subr.mxu0 0.0
    %2308 = vmatpush1.msra.mxu0 %v2250
    %2309 = vmatprep.subr.mxu0 0.0
    %2310 = vmatpush1.msra.mxu0 %v2251
    %2311 = vmatprep.subr.mxu0 0.0
    %2312 = vmatpush1.msra.mxu0 %v2252
    %2313 = vmatprep.subr.mxu0 0.0
    %2314 = vmatpush1.msra.mxu0 %v2253
    %2315 = vmatprep.subr.mxu0 0.0
    %2316 = vmatpush1.msra.mxu0 0.0
    %2317 = vmatprep.subr.mxu0 0.0
    %2318 = vmatpush1.msra.mxu0 0.0
    %2319 = vmatprep.subr.mxu0 0.0
    %2320 = vmatpush1.msra.mxu0 0.0
    %2321 = vmatprep.subr.mxu0 0.0
    %2322 = vmatpush1.msra.mxu0 0.0
    %2323 = vmatprep.subr.mxu0 0.0
    %2324 = vmatpush1.msra.mxu0 0.0
    %2325 = vmatprep.subr.mxu0 0.0
    %2326 = vmatpush1.msra.mxu0 0.0
    %2327 = vmatprep.subr.mxu0 0.0
    %2328 = vmatpush1.msra.mxu0 0.0
    %2329 = vmatprep.subr.mxu0 0.0
    %2330 = vmatpush1.msra.mxu0 0.0
    %2331 = vmatprep.subr.mxu0 0.0
    %2332 = vmatpush1.msra.mxu0 0.0
    %2333 = vmatprep.subr.mxu0 0.0
    %2334 = vmatpush1.msra.mxu0 0.0
    %2335 = vmatprep.subr.mxu0 0.0
    %2336 = vmatpush1.msra.mxu0 0.0
    %2337 = vmatprep.subr.mxu0 0.0
    %2338 = vmatpush1.msra.mxu0 0.0
    %2339 = vmatprep.subr.mxu0 0.0
    %2340 = vmatpush1.msra.mxu0 0.0
    %2341 = vmatprep.subr.mxu0 0.0
    %2342 = vmatpush1.msra.mxu0 0.0
    %2343 = vmatprep.subr.mxu0 0.0
    %2344 = vmatpush1.msra.mxu0 0.0
    %2345 = vmatprep.subr.mxu0 0.0
    %2346 = vmatpush1.msra.mxu0 0.0
    %2347 = vmatprep.subr.mxu0 0.0
    %2348 = vmatpush1.msra.mxu0 0.0
    %2349 = vmatprep.subr.mxu0 0.0
    %2350 = vmatpush1.msra.mxu0 0.0
    %2351 = vmatprep.subr.mxu0 0.0
    %2352 = vmatpush1.msra.mxu0 0.0
    %2353 = vmatprep.subr.mxu0 0.0
    %2354 = vmatpush1.msra.mxu0 0.0
    %2355 = vmatprep.subr.mxu0 0.0
    %2356 = vmatpush1.msra.mxu0 0.0
    %2357 = vmatprep.subr.mxu0 0.0
    %2358 = vmatpush1.msra.mxu0 0.0
    %2359 = vmatprep.subr.mxu0 0.0
    %2360 = vmatpush1.msra.mxu0 0.0
    %2361 = vmatprep.subr.mxu0 0.0
    %2362 = vmatpush1.msra.mxu0 0.0
    %2363 = vmatprep.subr.mxu0 0.0
    %2364 = vmatpush1.msra.mxu0 0.0
    %2365 = vmatprep.subr.mxu0 0.0
    %2366 = vmatpush1.msra.mxu0 0.0
    %2367 = vmatprep.subr.mxu0 0.0
    %2368 = vmatpush1.msra.mxu0 0.0
    %2369 = vmatprep.subr.mxu0 0.0
    %2370 = vmatpush1.msra.mxu0 0.0
    %2371 = vmatprep.mubr.f32.mxu0 0.0
    %2372 = vmatmul.mubr.f32.gmra.mrb[0].mxu0 %v2303
    %v2373 = vpop.f32.mrb[0].mxu0
    %v2374 = vadd.f32 %v2259, %v2373
    %v2375 = vpop.f32.mrb[0].mxu0
    %2376 = vmatprep.mubr.f32.mxu0 0.0
    %2377 = vmatmul.mubr.f32.gmra.mrb[0].mxu0 %v2305
    %v2378 = vpop.f32.mrb[0].mxu0
    %v2379 = vadd.f32 %v2259, %v2378
    %v2380 = vpop.f32.mrb[0].mxu0
    %2381 = vdwg.mxu0
    %2382 = vmax.xlane.f32.xlu0 %v2374
    %v2383 = vpop.xlane.xlu0 %2382
    %2384 = vmax.xlane.f32.xlu0 %v2379
    %v2385 = vpop.xlane.xlu0 %2384
    %v2386 = vsub.f32 %v2374, %v2383
    %v2387 = vsub.f32 %v2379, %v2385
    %v2388 = vmul.f32 %v2386, 1.442695
    %v2389 = vpow.pop %v2388
    %v2390 = vmul.f32 %v2387, 1.442695
    %v2391 = vpow.pop %v2390
    %2392 = vadd.xlane.f32.xlu0 %v2389
    %v2393 = vpop.xlane.xlu0 %2392
    %2394 = vadd.xlane.f32.xlu0 %v2391
    %v2395 = vpop.xlane.xlu0 %2394
    %v2396 = vlog2.pop %v2393
    %v2397 = vmul.f32 %v2396, 0.6931472
    %v2398 = vlog2.pop %v2395
    %v2399 = vmul.f32 %v2398, 0.6931472
    %v2400 = vsub.f32 %v2386, %v2397
    %v2401 = vsub.f32 %v2387, %v2399
    %2402 = vst [vmem:[#allocation14] sm:$0xff] %v2400
    %2403 = vst [vmem:[#allocation14 + $0x8] sm:$0xff] %v2401
    // Predicated region
    $region62: #{tpu_custom_call.1} parent=1 // pred_check
      _
    $region63: #{tpu_custom_call.1} parent=1 // pred_check_branch
      %2405 = sbr.rel (0) target = $region65
    $region64: #{tpu_custom_call.1} parent=1 // pred_region
      %s2407 = ssub.s32 256, 256
      %2408 = vsyncadd [#allocation5], %s2407
      %s2409 = sshll.u32 [#allocation14], 4
      %s2410 = int_to_ptr.vmem [resolvable:$true] %s2409
      %2415 = dma.vmem_to_hbm [thread:$0]  %s2410, 256, %s9, [#allocation5], 128, 128, 8
    $region65: #{tpu_custom_call.1} parent=1 // pred_fallthru
      _
    // Predicated region
    $region66: #{tpu_custom_call.1} parent=1 // pred_check
      _
    $region67: #{tpu_custom_call.1} parent=1 // pred_check_branch
      %2417 = sbr.rel (0) target = $region69
    $region68: #{tpu_custom_call.1} parent=1 // pred_region
      %2418 = dma.done [#allocation5], 256
    $region69: #{tpu_custom_call.1} parent=1 // pred_fallthru
      _
    %2419 = vsyncpa [#allocation4], 1
    %2420 = vsyncpa [#allocation7], 1
    %2421 = vsyncpa [#allocation10], 1
    %2422 = vsyncpa [#allocation13], 1
    %2423 = vsyncpa [#allocation5], 1

</llo_original>
